<compile_context>
chip_gen: v7x
topology: tpu7x:2x2x1
jax: 0.10.0
libtpu: 0.0.40
codegen_flags: <defaults>
</compile_context>

<pallas_src>
import functools

import jax
import jax.numpy as jnp
import numpy as np
from jax.experimental import pallas as pl
from jax.experimental.pallas import tpu as pltpu


def _round_up(v, m):
    return (v + m - 1) // m * m


# ----------------------------------------------------------------------------
# Pallas kernel: full GRU autoencoder forward (gate-packed, fc-folded decoder)
# ----------------------------------------------------------------------------
def gru_autoencoder_kernel(x_ref, w_ref, b_ref,
                           task_emb_ref, vec_ref, loss_ref,
                           *, hid, e_real):
    f32 = jnp.float32
    H = hid
    NK, LW = x_ref.shape

    # --- static, sublane-aligned views into the coalesced weight / bias slabs ---
    enc_wih = w_ref[0:LW, :]                     # (LW, LW)  x -> gates   (r|z|n at col g*H)
    enc_whh = w_ref[LW + 0 * H:LW + 1 * H, :]    # (H,  LW)  h -> gates   (r|z|n)
    dec_w0 = w_ref[LW + 1 * H:LW + 2 * H, :]     # (H,  LW)  decoder step 0   (r|z|n_ih|n_hh)
    dec_wc = w_ref[LW + 2 * H:LW + 3 * H, :]     # (H,  LW)  decoder steps>=1 (fc folded in)
    fc_w = w_ref[LW + 3 * H:LW + 4 * H, :]       # (H,  LW)  hidden -> reconstruction

    enc_bx = b_ref[0:1, :]                       # (1, LW)  b_ih + [b_hh_r, b_hh_z, 0]
    enc_bn = b_ref[1:2, :][:, 0:H]               # (1, H)   encoder b_hh_n (inside r*(...))
    dec_b0 = b_ref[2:3, :]                       # (1, LW)
    dec_bc = b_ref[3:4, :]                       # (1, LW)
    fc_b = b_ref[4:5, :]                         # (1, LW)

    # ---------------- encoder: nn.GRU over the NK-step sequence ----------------
    # input-to-hidden projection hoisted out of the recurrence: one dense matmul
    gx_all = jnp.dot(x_ref[...], enc_wih, preferred_element_type=f32) + enc_bx   # (NK, LW)

    h = jnp.zeros((1, H), f32)
    hs = []
    for t in range(NK):                                   # fully unrolled (static trip count)
        gx = gx_all[t:t + 1, :]
        gh = jnp.dot(h, enc_whh, preferred_element_type=f32)         # ONE 128-lane MXU push
        r = jax.nn.sigmoid(gx[:, 0:H] + gh[:, 0:H])
        z = jax.nn.sigmoid(gx[:, H:2 * H] + gh[:, H:2 * H])
        n = jnp.tanh(gx[:, 2 * H:3 * H] + r * (gh[:, 2 * H:3 * H] + enc_bn))
        h = (1.0 - z) * n + z * h
        hs.append(h)

    emb = jnp.concatenate(hs, axis=0)                     # (NK, H) single dense store
    task_emb_ref[...] = emb
    vec_ref[...] = jnp.mean(emb, axis=0, keepdims=True)   # temporal mean

    # -------- decoder: GRUCell with the fc Linear folded into the recurrence --------
    def gru_step(g, h_prev):
        # gate groups (r | z | n_ih | n_hh) at H-lane offsets of a single vreg
        r = jax.nn.sigmoid(g[:, 0:H])
        z = jax.nn.sigmoid(g[:, H:2 * H])
        n = jnp.tanh(g[:, 2 * H:3 * H] + r * g[:, 3 * H:4 * H])
        return (1.0 - z) * n + z * h_prev

    # step 0: input is zeros -> only the ih biases contribute from the x path
    hd = gru_step(jnp.dot(h, dec_w0, preferred_element_type=f32) + dec_b0, h)
    hds = [hd]
    # steps 1..NK-1: x_t = fc(h_t) folded in -> ONE matmul per step on the serial chain
    for _ in range(NK - 1):
        hd = gru_step(jnp.dot(hd, dec_wc, preferred_element_type=f32) + dec_bc, hd)
        hds.append(hd)

    # reconstruction (stacked already in reversed order) as ONE dense matmul, then the MSE
    hd_rev = jnp.concatenate(hds[::-1], axis=0)                                   # (NK, H)
    rec = jnp.dot(hd_rev, fc_w, preferred_element_type=f32) + fc_b                # (NK, LW)
    d = rec - x_ref[...]                                  # padded lanes are exactly 0 on both sides
    sq = jnp.sum(d * d, axis=1, keepdims=True)            # (NK, 1)
    loss_ref[...] = jnp.sum(sq, axis=0, keepdims=True) * (1.0 / (NK * e_real))


# ----------------------------------------------------------------------------
# Host-side weight preparation: gate-pack, fc-fold, bias-fuse, pad, coalesce
# ----------------------------------------------------------------------------
def prepare_params(params, E, H):
    assert H % 8 == 0
    f32 = jnp.float32
    Ep = _round_up(E, 128)
    G = _round_up(4 * H, 128)           # packed gate lane width (r|z|n_ih|n_hh)
    LW = max(Ep, G)                     # common lane width of all slabs
    hi_dot = functools.partial(jnp.dot, precision=jax.lax.Precision.HIGHEST)

    enc_wih, enc_whh = params["enc_wih"], params["enc_whh"]
    enc_bih, enc_bhh = params["enc_bih"], params["enc_bhh"]
    dec_wih, dec_whh = params["dec_wih"], params["dec_whh"]
    dec_bih, dec_bhh = params["dec_bih"], params["dec_bhh"]
    fc_w, fc_b = params["fc_w"], params["fc_b"]

    def place(dst, col0, piece):
        piece = piece.astype(f32)
        return dst.at[:piece.shape[0], col0:col0 + piece.shape[1]].set(piece)

    # encoder x->gates (rows [0,E)), gates packed at column offsets g*H (order r|z|n)
    enc_wih_p = jnp.zeros((LW, LW), f32)
    for g in range(3):
        enc_wih_p = place(enc_wih_p, g * H, enc_wih[g])
    # encoder h->gates
    enc_whh_p = jnp.zeros((H, LW), f32)
    for g in range(3):
        enc_whh_p = place(enc_whh_p, g * H, enc_whh[g])

    # decoder step 0 (input is zeros): groups r|z|n_ih|n_hh ; x-path contributes bias only
    dec_w0_p = jnp.zeros((H, LW), f32)
    dec_w0_p = place(dec_w0_p, 0 * H, dec_whh[0])
    dec_w0_p = place(dec_w0_p, 1 * H, dec_whh[1])
    dec_w0_p = place(dec_w0_p, 3 * H, dec_whh[2])

    # decoder steps >= 1: x_t = fc(h_t) folded into the recurrent weight
    dec_wc_p = jnp.zeros((H, LW), f32)
    dec_wc_p = place(dec_wc_p, 0 * H, hi_dot(fc_w, dec_wih[0]) + dec_whh[0])
    dec_wc_p = place(dec_wc_p, 1 * H, hi_dot(fc_w, dec_wih[1]) + dec_whh[1])
    dec_wc_p = place(dec_wc_p, 2 * H, hi_dot(fc_w, dec_wih[2]))
    dec_wc_p = place(dec_wc_p, 3 * H, dec_whh[2])

    fc_w_p = jnp.zeros((H, LW), f32)
    fc_w_p = place(fc_w_p, 0, fc_w)

    w_all = jnp.concatenate([enc_wih_p, enc_whh_p, dec_w0_p, dec_wc_p, fc_w_p], axis=0)

    # bias slab: row0 enc_bx | row1 enc_b_hh_n | row2 dec_b0 | row3 dec_bc | row4 fc_b
    def row(pieces):
        out = jnp.zeros((1, LW), f32)
        for col0, piece in pieces:
            out = out.at[:, col0:col0 + piece.shape[1]].set(piece.astype(f32))
        return out

    b_rows = [
        row([(0 * H, enc_bih[0] + enc_bhh[0]), (1 * H, enc_bih[1] + enc_bhh[1]),
             (2 * H, enc_bih[2])]),
        row([(0, enc_bhh[2])]),
        row([(0 * H, dec_bih[0] + dec_bhh[0]), (1 * H, dec_bih[1] + dec_bhh[1]),
             (2 * H, dec_bih[2]), (3 * H, dec_bhh[2])]),
        row([(0 * H, hi_dot(fc_b, dec_wih[0]) + dec_bih[0] + dec_bhh[0]),
             (1 * H, hi_dot(fc_b, dec_wih[1]) + dec_bih[1] + dec_bhh[1]),
             (2 * H, hi_dot(fc_b, dec_wih[2]) + dec_bih[2]),
             (3 * H, dec_bhh[2])]),
        row([(0, fc_b)]),
    ]
    b_all = jnp.concatenate(b_rows + [jnp.zeros((8 - len(b_rows), LW), f32)], axis=0)

    return dict(w_all=w_all, b_all=b_all)


# ----------------------------------------------------------------------------
# Wrapper
# ----------------------------------------------------------------------------
def lstm_autoencoder_forward(x, w_all, b_all, hid):
    """x: (NK, E) for one task -> (task_emb_vec (1,H), task_emb (NK,H), loss_rec scalar)."""
    NK, E = x.shape
    H = hid
    LW = w_all.shape[1]

    x_pad = jnp.zeros((NK, LW), jnp.float32).at[:, :E].set(x.astype(jnp.float32))

    kernel = functools.partial(gru_autoencoder_kernel, hid=H, e_real=E)
    vmem = functools.partial(pl.BlockSpec, memory_space=pltpu.MemorySpace.VMEM)

    task_emb, vec, loss = pl.pallas_call(
        kernel,
        out_shape=(jax.ShapeDtypeStruct((NK, H), jnp.float32),   # per-step hidden states
                   jax.ShapeDtypeStruct((1, H), jnp.float32),    # task_emb_vec
                   jax.ShapeDtypeStruct((1, 1), jnp.float32)),   # loss_rec
        in_specs=[vmem(), vmem(), vmem()],
        out_specs=(vmem(), vmem(), vmem()),
    )(x_pad, w_all, b_all)

    return vec, task_emb, loss[0, 0]


# ----------------------------------------------------------------------------
# Deterministic parameter init (synthetic, mirrors the module's __init__)
# ----------------------------------------------------------------------------
def init_params(key, elem_num, hidden):
    ks = jax.random.split(key, 6)

    def xavier(k, shape, fan_in, fan_out):
        lim = np.sqrt(6.0 / (fan_in + fan_out))
        return jax.random.uniform(k, shape, jnp.float32, -lim, lim)

    # PyTorch: weight_ih (3H, E), weight_hh (3H, H); here gate-stacked & transposed.
    enc_wih = xavier(ks[0], (3, elem_num, hidden), elem_num, 3 * hidden)
    enc_whh = xavier(ks[1], (3, hidden, hidden), hidden, 3 * hidden)
    dec_wih = xavier(ks[2], (3, elem_num, hidden), elem_num, 3 * hidden)
    dec_whh = xavier(ks[3], (3, hidden, hidden), hidden, 3 * hidden)
    # bias_ih = 0 ; bias_hh = ones with the last third (the "n" gate) zeroed
    b_ih = jnp.zeros((3, 1, hidden), jnp.float32)
    b_hh = jnp.concatenate(
        [jnp.ones((2, 1, hidden), jnp.float32), jnp.zeros((1, 1, hidden), jnp.float32)], axis=0)
    # fc: truncated-normal(std=1.0) weight, bias = 0.1 ; stored transposed (H, E)
    fc_w = jax.random.truncated_normal(ks[4], -2.0, 2.0, (hidden, elem_num), jnp.float32)
    fc_b = jnp.full((1, elem_num), 0.1, jnp.float32)

    return dict(
        enc_wih=enc_wih, enc_whh=enc_whh, enc_bih=b_ih, enc_bhh=b_hh,
        dec_wih=dec_wih, dec_whh=dec_whh, dec_bih=b_ih, dec_bhh=b_hh,
        fc_w=fc_w, fc_b=fc_b,
    )


# ----------------------------------------------------------------------------
# Pure-JAX reference (high-precision dots) for the correctness check
# ----------------------------------------------------------------------------
def reference_forward(x, p):
    dot = functools.partial(jnp.dot, precision=jax.lax.Precision.HIGHEST)
    NK, E = x.shape
    H = p["enc_wih"].shape[2]

    def cell(xi, h, wih, whh, bih, bhh):
        r = jax.nn.sigmoid(dot(xi, wih[0]) + bih[0] + dot(h, whh[0]) + bhh[0])
        z = jax.nn.sigmoid(dot(xi, wih[1]) + bih[1] + dot(h, whh[1]) + bhh[1])
        n = jnp.tanh(dot(xi, wih[2]) + bih[2] + r * (dot(h, whh[2]) + bhh[2]))
        return (1.0 - z) * n + z * h

    h = jnp.zeros((1, H), jnp.float32)
    hs = []
    for t in range(NK):
        h = cell(x[t:t + 1], h, p["enc_wih"], p["enc_whh"], p["enc_bih"], p["enc_bhh"])
        hs.append(h)
    task_emb = jnp.concatenate(hs, axis=0)
    vec = jnp.mean(task_emb, axis=0, keepdims=True)

    xi = jnp.zeros((1, E), jnp.float32)
    hd = h
    outs = []
    for t in range(NK):
        hd = cell(xi, hd, p["dec_wih"], p["dec_whh"], p["dec_bih"], p["dec_bhh"])
        xi = dot(hd, p["fc_w"]) + p["fc_b"]
        outs.append(xi)
    dec = jnp.concatenate(outs[::-1], axis=0)
    loss = jnp.mean((x - dec) ** 2)
    return vec, task_emb, loss


if __name__ == "__main__":
    # Small shapes consistent with the module: NK images, elem_num = 64 + num_classes_per_set
    NK = 8
    NUM_CLASSES = 4
    ELEM = 64 + NUM_CLASSES          # 68
    TASK_EMB_DIM = 32                # hidden size (128 in the paper; small here)

    key = jax.random.PRNGKey(0)
    k_x, k_p = jax.random.split(key)
    x = jax.random.normal(k_x, (NK, ELEM), jnp.float32)
    params = init_params(k_p, ELEM, TASK_EMB_DIM)
    prepped = prepare_params(params, ELEM, TASK_EMB_DIM)

    fwd = jax.jit(functools.partial(lstm_autoencoder_forward, hid=TASK_EMB_DIM))
    vec, task_emb, loss = fwd(x, prepped["w_all"], prepped["b_all"])
    jax.block_until_ready((vec, task_emb, loss))

    # sanity-check against a pure-JAX reference
    vec_r, emb_r, loss_r = reference_forward(x, params)
    np.testing.assert_allclose(np.asarray(vec), np.asarray(vec_r), rtol=5e-3, atol=5e-3)
    np.testing.assert_allclose(np.asarray(task_emb), np.asarray(emb_r), rtol=5e-3, atol=5e-3)
    np.testing.assert_allclose(np.asarray(loss), np.asarray(loss_r), rtol=5e-3, atol=5e-3)

    print("KERNEL_OK")
</pallas_src>

<mosaic_0001>
module attributes {stable_mosaic.version = 11 : i64} {
  func.func @gru_autoencoder_kernel(%arg0: memref<8x128xf32, #tpu.memory_space<vmem>>, %arg1: memref<256x128xf32, #tpu.memory_space<vmem>>, %arg2: memref<8x128xf32, #tpu.memory_space<vmem>>, %arg3: memref<8x32xf32, #tpu.memory_space<vmem>>, %arg4: memref<1x32xf32, #tpu.memory_space<vmem>>, %arg5: memref<1x1xf32, #tpu.memory_space<vmem>>) attributes {dimension_semantics = [], scalar_prefetch = 0 : i64, scratch_operands = 0 : i64, tpu.core_type = #tpu.core_type<tc>} {
    %c0 = arith.constant 0 : index
    %c0_0 = arith.constant 0 : index
    %0 = vector.load %arg1[%c0, %c0_0] : memref<256x128xf32, #tpu.memory_space<vmem>>, vector<128x128xf32>
    %c128 = arith.constant 128 : index
    %c0_1 = arith.constant 0 : index
    %1 = vector.load %arg1[%c128, %c0_1] : memref<256x128xf32, #tpu.memory_space<vmem>>, vector<32x128xf32>
    %c160 = arith.constant 160 : index
    %c0_2 = arith.constant 0 : index
    %2 = vector.load %arg1[%c160, %c0_2] : memref<256x128xf32, #tpu.memory_space<vmem>>, vector<32x128xf32>
    %c192 = arith.constant 192 : index
    %c0_3 = arith.constant 0 : index
    %3 = vector.load %arg1[%c192, %c0_3] : memref<256x128xf32, #tpu.memory_space<vmem>>, vector<32x128xf32>
    %c224 = arith.constant 224 : index
    %c0_4 = arith.constant 0 : index
    %4 = vector.load %arg1[%c224, %c0_4] : memref<256x128xf32, #tpu.memory_space<vmem>>, vector<32x128xf32>
    %c0_5 = arith.constant 0 : index
    %c0_6 = arith.constant 0 : index
    %5 = vector.load %arg2[%c0_5, %c0_6] : memref<8x128xf32, #tpu.memory_space<vmem>>, vector<1x128xf32>
    %c1 = arith.constant 1 : index
    %c0_7 = arith.constant 0 : index
    %6 = vector.load %arg2[%c1, %c0_7] : memref<8x128xf32, #tpu.memory_space<vmem>>, vector<1x128xf32>
    %7 = vector.extract_strided_slice %6 {offsets = [0, 0], sizes = [1, 32], strides = [1, 1]} : vector<1x128xf32> to vector<1x32xf32>
    %c2 = arith.constant 2 : index
    %c0_8 = arith.constant 0 : index
    %8 = vector.load %arg2[%c2, %c0_8] : memref<8x128xf32, #tpu.memory_space<vmem>>, vector<1x128xf32>
    %c3 = arith.constant 3 : index
    %c0_9 = arith.constant 0 : index
    %9 = vector.load %arg2[%c3, %c0_9] : memref<8x128xf32, #tpu.memory_space<vmem>>, vector<1x128xf32>
    %c4 = arith.constant 4 : index
    %c0_10 = arith.constant 0 : index
    %10 = vector.load %arg2[%c4, %c0_10] : memref<8x128xf32, #tpu.memory_space<vmem>>, vector<1x128xf32>
    %c0_11 = arith.constant 0 : index
    %c0_12 = arith.constant 0 : index
    %11 = vector.load %arg0[%c0_11, %c0_12] : memref<8x128xf32, #tpu.memory_space<vmem>>, vector<8x128xf32>
    %cst = arith.constant dense<0.000000e+00> : vector<8x128xf32>
    %12 = tpu.matmul %11, %0, %cst {dimension_numbers = #tpu.dot_dimension_numbers<[1], [0], [0], [1], [0, 0, 1, 1], [], []>} : vector<8x128xf32>, vector<128x128xf32>, vector<8x128xf32> -> vector<8x128xf32>
    %13 = vector.broadcast %5 : vector<1x128xf32> to vector<8x128xf32>
    %14 = arith.addf %12, %13 : vector<8x128xf32>
    %cst_13 = arith.constant 0.000000e+00 : f32
    %15 = vector.broadcast %cst_13 : f32 to vector<1x32xf32>
    %16 = vector.extract_strided_slice %14 {offsets = [0, 0], sizes = [1, 128], strides = [1, 1]} : vector<8x128xf32> to vector<1x128xf32>
    %cst_14 = arith.constant dense<0.000000e+00> : vector<1x128xf32>
    %17 = tpu.matmul %15, %1, %cst_14 {dimension_numbers = #tpu.dot_dimension_numbers<[1], [0], [0], [1], [0, 0, 1, 1], [], []>} : vector<1x32xf32>, vector<32x128xf32>, vector<1x128xf32> -> vector<1x128xf32>
    %18 = vector.extract_strided_slice %16 {offsets = [0, 0], sizes = [1, 32], strides = [1, 1]} : vector<1x128xf32> to vector<1x32xf32>
    %19 = vector.extract_strided_slice %17 {offsets = [0, 0], sizes = [1, 32], strides = [1, 1]} : vector<1x128xf32> to vector<1x32xf32>
    %20 = arith.addf %18, %19 : vector<1x32xf32>
    %21 = arith.negf %20 : vector<1x32xf32>
    %22 = math.exp %21 : vector<1x32xf32>
    %cst_15 = arith.constant 1.000000e+00 : f32
    %23 = vector.broadcast %cst_15 : f32 to vector<1x32xf32>
    %24 = arith.addf %23, %22 : vector<1x32xf32>
    %25 = arith.divf %23, %24 : vector<1x32xf32>
    %26 = vector.extract_strided_slice %16 {offsets = [0, 32], sizes = [1, 32], strides = [1, 1]} : vector<1x128xf32> to vector<1x32xf32>
    %27 = vector.extract_strided_slice %17 {offsets = [0, 32], sizes = [1, 32], strides = [1, 1]} : vector<1x128xf32> to vector<1x32xf32>
    %28 = arith.addf %26, %27 : vector<1x32xf32>
    %29 = arith.negf %28 : vector<1x32xf32>
    %30 = math.exp %29 : vector<1x32xf32>
    %cst_16 = arith.constant 1.000000e+00 : f32
    %31 = vector.broadcast %cst_16 : f32 to vector<1x32xf32>
    %32 = arith.addf %31, %30 : vector<1x32xf32>
    %33 = arith.divf %31, %32 : vector<1x32xf32>
    %34 = vector.extract_strided_slice %16 {offsets = [0, 64], sizes = [1, 32], strides = [1, 1]} : vector<1x128xf32> to vector<1x32xf32>
    %35 = vector.extract_strided_slice %17 {offsets = [0, 64], sizes = [1, 32], strides = [1, 1]} : vector<1x128xf32> to vector<1x32xf32>
    %36 = arith.addf %35, %7 : vector<1x32xf32>
    %37 = arith.mulf %25, %36 : vector<1x32xf32>
    %38 = arith.addf %34, %37 : vector<1x32xf32>
    %39 = math.tanh %38 : vector<1x32xf32>
    %cst_17 = arith.constant 1.000000e+00 : f32
    %40 = vector.broadcast %cst_17 : f32 to vector<1x32xf32>
    %41 = arith.subf %40, %33 : vector<1x32xf32>
    %42 = arith.mulf %41, %39 : vector<1x32xf32>
    %43 = arith.mulf %33, %15 : vector<1x32xf32>
    %44 = arith.addf %42, %43 : vector<1x32xf32>
    %45 = vector.extract_strided_slice %14 {offsets = [1, 0], sizes = [1, 128], strides = [1, 1]} : vector<8x128xf32> to vector<1x128xf32>
    %cst_18 = arith.constant dense<0.000000e+00> : vector<1x128xf32>
    %46 = tpu.matmul %44, %1, %cst_18 {dimension_numbers = #tpu.dot_dimension_numbers<[1], [0], [0], [1], [0, 0, 1, 1], [], []>} : vector<1x32xf32>, vector<32x128xf32>, vector<1x128xf32> -> vector<1x128xf32>
    %47 = vector.extract_strided_slice %45 {offsets = [0, 0], sizes = [1, 32], strides = [1, 1]} : vector<1x128xf32> to vector<1x32xf32>
    %48 = vector.extract_strided_slice %46 {offsets = [0, 0], sizes = [1, 32], strides = [1, 1]} : vector<1x128xf32> to vector<1x32xf32>
    %49 = arith.addf %47, %48 : vector<1x32xf32>
    %50 = arith.negf %49 : vector<1x32xf32>
    %51 = math.exp %50 : vector<1x32xf32>
    %cst_19 = arith.constant 1.000000e+00 : f32
    %52 = vector.broadcast %cst_19 : f32 to vector<1x32xf32>
    %53 = arith.addf %52, %51 : vector<1x32xf32>
    %54 = arith.divf %52, %53 : vector<1x32xf32>
    %55 = vector.extract_strided_slice %45 {offsets = [0, 32], sizes = [1, 32], strides = [1, 1]} : vector<1x128xf32> to vector<1x32xf32>
    %56 = vector.extract_strided_slice %46 {offsets = [0, 32], sizes = [1, 32], strides = [1, 1]} : vector<1x128xf32> to vector<1x32xf32>
    %57 = arith.addf %55, %56 : vector<1x32xf32>
    %58 = arith.negf %57 : vector<1x32xf32>
    %59 = math.exp %58 : vector<1x32xf32>
    %cst_20 = arith.constant 1.000000e+00 : f32
    %60 = vector.broadcast %cst_20 : f32 to vector<1x32xf32>
    %61 = arith.addf %60, %59 : vector<1x32xf32>
    %62 = arith.divf %60, %61 : vector<1x32xf32>
    %63 = vector.extract_strided_slice %45 {offsets = [0, 64], sizes = [1, 32], strides = [1, 1]} : vector<1x128xf32> to vector<1x32xf32>
    %64 = vector.extract_strided_slice %46 {offsets = [0, 64], sizes = [1, 32], strides = [1, 1]} : vector<1x128xf32> to vector<1x32xf32>
    %65 = arith.addf %64, %7 : vector<1x32xf32>
    %66 = arith.mulf %54, %65 : vector<1x32xf32>
    %67 = arith.addf %63, %66 : vector<1x32xf32>
    %68 = math.tanh %67 : vector<1x32xf32>
    %cst_21 = arith.constant 1.000000e+00 : f32
    %69 = vector.broadcast %cst_21 : f32 to vector<1x32xf32>
    %70 = arith.subf %69, %62 : vector<1x32xf32>
    %71 = arith.mulf %70, %68 : vector<1x32xf32>
    %72 = arith.mulf %62, %44 : vector<1x32xf32>
    %73 = arith.addf %71, %72 : vector<1x32xf32>
    %74 = vector.extract_strided_slice %14 {offsets = [2, 0], sizes = [1, 128], strides = [1, 1]} : vector<8x128xf32> to vector<1x128xf32>
    %cst_22 = arith.constant dense<0.000000e+00> : vector<1x128xf32>
    %75 = tpu.matmul %73, %1, %cst_22 {dimension_numbers = #tpu.dot_dimension_numbers<[1], [0], [0], [1], [0, 0, 1, 1], [], []>} : vector<1x32xf32>, vector<32x128xf32>, vector<1x128xf32> -> vector<1x128xf32>
    %76 = vector.extract_strided_slice %74 {offsets = [0, 0], sizes = [1, 32], strides = [1, 1]} : vector<1x128xf32> to vector<1x32xf32>
    %77 = vector.extract_strided_slice %75 {offsets = [0, 0], sizes = [1, 32], strides = [1, 1]} : vector<1x128xf32> to vector<1x32xf32>
    %78 = arith.addf %76, %77 : vector<1x32xf32>
    %79 = arith.negf %78 : vector<1x32xf32>
    %80 = math.exp %79 : vector<1x32xf32>
    %cst_23 = arith.constant 1.000000e+00 : f32
    %81 = vector.broadcast %cst_23 : f32 to vector<1x32xf32>
    %82 = arith.addf %81, %80 : vector<1x32xf32>
    %83 = arith.divf %81, %82 : vector<1x32xf32>
    %84 = vector.extract_strided_slice %74 {offsets = [0, 32], sizes = [1, 32], strides = [1, 1]} : vector<1x128xf32> to vector<1x32xf32>
    %85 = vector.extract_strided_slice %75 {offsets = [0, 32], sizes = [1, 32], strides = [1, 1]} : vector<1x128xf32> to vector<1x32xf32>
    %86 = arith.addf %84, %85 : vector<1x32xf32>
    %87 = arith.negf %86 : vector<1x32xf32>
    %88 = math.exp %87 : vector<1x32xf32>
    %cst_24 = arith.constant 1.000000e+00 : f32
    %89 = vector.broadcast %cst_24 : f32 to vector<1x32xf32>
    %90 = arith.addf %89, %88 : vector<1x32xf32>
    %91 = arith.divf %89, %90 : vector<1x32xf32>
    %92 = vector.extract_strided_slice %74 {offsets = [0, 64], sizes = [1, 32], strides = [1, 1]} : vector<1x128xf32> to vector<1x32xf32>
    %93 = vector.extract_strided_slice %75 {offsets = [0, 64], sizes = [1, 32], strides = [1, 1]} : vector<1x128xf32> to vector<1x32xf32>
    %94 = arith.addf %93, %7 : vector<1x32xf32>
    %95 = arith.mulf %83, %94 : vector<1x32xf32>
    %96 = arith.addf %92, %95 : vector<1x32xf32>
    %97 = math.tanh %96 : vector<1x32xf32>
    %cst_25 = arith.constant 1.000000e+00 : f32
    %98 = vector.broadcast %cst_25 : f32 to vector<1x32xf32>
    %99 = arith.subf %98, %91 : vector<1x32xf32>
    %100 = arith.mulf %99, %97 : vector<1x32xf32>
    %101 = arith.mulf %91, %73 : vector<1x32xf32>
    %102 = arith.addf %100, %101 : vector<1x32xf32>
    %103 = vector.extract_strided_slice %14 {offsets = [3, 0], sizes = [1, 128], strides = [1, 1]} : vector<8x128xf32> to vector<1x128xf32>
    %cst_26 = arith.constant dense<0.000000e+00> : vector<1x128xf32>
    %104 = tpu.matmul %102, %1, %cst_26 {dimension_numbers = #tpu.dot_dimension_numbers<[1], [0], [0], [1], [0, 0, 1, 1], [], []>} : vector<1x32xf32>, vector<32x128xf32>, vector<1x128xf32> -> vector<1x128xf32>
    %105 = vector.extract_strided_slice %103 {offsets = [0, 0], sizes = [1, 32], strides = [1, 1]} : vector<1x128xf32> to vector<1x32xf32>
    %106 = vector.extract_strided_slice %104 {offsets = [0, 0], sizes = [1, 32], strides = [1, 1]} : vector<1x128xf32> to vector<1x32xf32>
    %107 = arith.addf %105, %106 : vector<1x32xf32>
    %108 = arith.negf %107 : vector<1x32xf32>
    %109 = math.exp %108 : vector<1x32xf32>
    %cst_27 = arith.constant 1.000000e+00 : f32
    %110 = vector.broadcast %cst_27 : f32 to vector<1x32xf32>
    %111 = arith.addf %110, %109 : vector<1x32xf32>
    %112 = arith.divf %110, %111 : vector<1x32xf32>
    %113 = vector.extract_strided_slice %103 {offsets = [0, 32], sizes = [1, 32], strides = [1, 1]} : vector<1x128xf32> to vector<1x32xf32>
    %114 = vector.extract_strided_slice %104 {offsets = [0, 32], sizes = [1, 32], strides = [1, 1]} : vector<1x128xf32> to vector<1x32xf32>
    %115 = arith.addf %113, %114 : vector<1x32xf32>
    %116 = arith.negf %115 : vector<1x32xf32>
    %117 = math.exp %116 : vector<1x32xf32>
    %cst_28 = arith.constant 1.000000e+00 : f32
    %118 = vector.broadcast %cst_28 : f32 to vector<1x32xf32>
    %119 = arith.addf %118, %117 : vector<1x32xf32>
    %120 = arith.divf %118, %119 : vector<1x32xf32>
    %121 = vector.extract_strided_slice %103 {offsets = [0, 64], sizes = [1, 32], strides = [1, 1]} : vector<1x128xf32> to vector<1x32xf32>
    %122 = vector.extract_strided_slice %104 {offsets = [0, 64], sizes = [1, 32], strides = [1, 1]} : vector<1x128xf32> to vector<1x32xf32>
    %123 = arith.addf %122, %7 : vector<1x32xf32>
    %124 = arith.mulf %112, %123 : vector<1x32xf32>
    %125 = arith.addf %121, %124 : vector<1x32xf32>
    %126 = math.tanh %125 : vector<1x32xf32>
    %cst_29 = arith.constant 1.000000e+00 : f32
    %127 = vector.broadcast %cst_29 : f32 to vector<1x32xf32>
    %128 = arith.subf %127, %120 : vector<1x32xf32>
    %129 = arith.mulf %128, %126 : vector<1x32xf32>
    %130 = arith.mulf %120, %102 : vector<1x32xf32>
    %131 = arith.addf %129, %130 : vector<1x32xf32>
    %132 = vector.extract_strided_slice %14 {offsets = [4, 0], sizes = [1, 128], strides = [1, 1]} : vector<8x128xf32> to vector<1x128xf32>
    %cst_30 = arith.constant dense<0.000000e+00> : vector<1x128xf32>
    %133 = tpu.matmul %131, %1, %cst_30 {dimension_numbers = #tpu.dot_dimension_numbers<[1], [0], [0], [1], [0, 0, 1, 1], [], []>} : vector<1x32xf32>, vector<32x128xf32>, vector<1x128xf32> -> vector<1x128xf32>
    %134 = vector.extract_strided_slice %132 {offsets = [0, 0], sizes = [1, 32], strides = [1, 1]} : vector<1x128xf32> to vector<1x32xf32>
    %135 = vector.extract_strided_slice %133 {offsets = [0, 0], sizes = [1, 32], strides = [1, 1]} : vector<1x128xf32> to vector<1x32xf32>
    %136 = arith.addf %134, %135 : vector<1x32xf32>
    %137 = arith.negf %136 : vector<1x32xf32>
    %138 = math.exp %137 : vector<1x32xf32>
    %cst_31 = arith.constant 1.000000e+00 : f32
    %139 = vector.broadcast %cst_31 : f32 to vector<1x32xf32>
    %140 = arith.addf %139, %138 : vector<1x32xf32>
    %141 = arith.divf %139, %140 : vector<1x32xf32>
    %142 = vector.extract_strided_slice %132 {offsets = [0, 32], sizes = [1, 32], strides = [1, 1]} : vector<1x128xf32> to vector<1x32xf32>
    %143 = vector.extract_strided_slice %133 {offsets = [0, 32], sizes = [1, 32], strides = [1, 1]} : vector<1x128xf32> to vector<1x32xf32>
    %144 = arith.addf %142, %143 : vector<1x32xf32>
    %145 = arith.negf %144 : vector<1x32xf32>
    %146 = math.exp %145 : vector<1x32xf32>
    %cst_32 = arith.constant 1.000000e+00 : f32
    %147 = vector.broadcast %cst_32 : f32 to vector<1x32xf32>
    %148 = arith.addf %147, %146 : vector<1x32xf32>
    %149 = arith.divf %147, %148 : vector<1x32xf32>
    %150 = vector.extract_strided_slice %132 {offsets = [0, 64], sizes = [1, 32], strides = [1, 1]} : vector<1x128xf32> to vector<1x32xf32>
    %151 = vector.extract_strided_slice %133 {offsets = [0, 64], sizes = [1, 32], strides = [1, 1]} : vector<1x128xf32> to vector<1x32xf32>
    %152 = arith.addf %151, %7 : vector<1x32xf32>
    %153 = arith.mulf %141, %152 : vector<1x32xf32>
    %154 = arith.addf %150, %153 : vector<1x32xf32>
    %155 = math.tanh %154 : vector<1x32xf32>
    %cst_33 = arith.constant 1.000000e+00 : f32
    %156 = vector.broadcast %cst_33 : f32 to vector<1x32xf32>
    %157 = arith.subf %156, %149 : vector<1x32xf32>
    %158 = arith.mulf %157, %155 : vector<1x32xf32>
    %159 = arith.mulf %149, %131 : vector<1x32xf32>
    %160 = arith.addf %158, %159 : vector<1x32xf32>
    %161 = vector.extract_strided_slice %14 {offsets = [5, 0], sizes = [1, 128], strides = [1, 1]} : vector<8x128xf32> to vector<1x128xf32>
    %cst_34 = arith.constant dense<0.000000e+00> : vector<1x128xf32>
    %162 = tpu.matmul %160, %1, %cst_34 {dimension_numbers = #tpu.dot_dimension_numbers<[1], [0], [0], [1], [0, 0, 1, 1], [], []>} : vector<1x32xf32>, vector<32x128xf32>, vector<1x128xf32> -> vector<1x128xf32>
    %163 = vector.extract_strided_slice %161 {offsets = [0, 0], sizes = [1, 32], strides = [1, 1]} : vector<1x128xf32> to vector<1x32xf32>
    %164 = vector.extract_strided_slice %162 {offsets = [0, 0], sizes = [1, 32], strides = [1, 1]} : vector<1x128xf32> to vector<1x32xf32>
    %165 = arith.addf %163, %164 : vector<1x32xf32>
    %166 = arith.negf %165 : vector<1x32xf32>
    %167 = math.exp %166 : vector<1x32xf32>
    %cst_35 = arith.constant 1.000000e+00 : f32
    %168 = vector.broadcast %cst_35 : f32 to vector<1x32xf32>
    %169 = arith.addf %168, %167 : vector<1x32xf32>
    %170 = arith.divf %168, %169 : vector<1x32xf32>
    %171 = vector.extract_strided_slice %161 {offsets = [0, 32], sizes = [1, 32], strides = [1, 1]} : vector<1x128xf32> to vector<1x32xf32>
    %172 = vector.extract_strided_slice %162 {offsets = [0, 32], sizes = [1, 32], strides = [1, 1]} : vector<1x128xf32> to vector<1x32xf32>
    %173 = arith.addf %171, %172 : vector<1x32xf32>
    %174 = arith.negf %173 : vector<1x32xf32>
    %175 = math.exp %174 : vector<1x32xf32>
    %cst_36 = arith.constant 1.000000e+00 : f32
    %176 = vector.broadcast %cst_36 : f32 to vector<1x32xf32>
    %177 = arith.addf %176, %175 : vector<1x32xf32>
    %178 = arith.divf %176, %177 : vector<1x32xf32>
    %179 = vector.extract_strided_slice %161 {offsets = [0, 64], sizes = [1, 32], strides = [1, 1]} : vector<1x128xf32> to vector<1x32xf32>
    %180 = vector.extract_strided_slice %162 {offsets = [0, 64], sizes = [1, 32], strides = [1, 1]} : vector<1x128xf32> to vector<1x32xf32>
    %181 = arith.addf %180, %7 : vector<1x32xf32>
    %182 = arith.mulf %170, %181 : vector<1x32xf32>
    %183 = arith.addf %179, %182 : vector<1x32xf32>
    %184 = math.tanh %183 : vector<1x32xf32>
    %cst_37 = arith.constant 1.000000e+00 : f32
    %185 = vector.broadcast %cst_37 : f32 to vector<1x32xf32>
    %186 = arith.subf %185, %178 : vector<1x32xf32>
    %187 = arith.mulf %186, %184 : vector<1x32xf32>
    %188 = arith.mulf %178, %160 : vector<1x32xf32>
    %189 = arith.addf %187, %188 : vector<1x32xf32>
    %190 = vector.extract_strided_slice %14 {offsets = [6, 0], sizes = [1, 128], strides = [1, 1]} : vector<8x128xf32> to vector<1x128xf32>
    %cst_38 = arith.constant dense<0.000000e+00> : vector<1x128xf32>
    %191 = tpu.matmul %189, %1, %cst_38 {dimension_numbers = #tpu.dot_dimension_numbers<[1], [0], [0], [1], [0, 0, 1, 1], [], []>} : vector<1x32xf32>, vector<32x128xf32>, vector<1x128xf32> -> vector<1x128xf32>
    %192 = vector.extract_strided_slice %190 {offsets = [0, 0], sizes = [1, 32], strides = [1, 1]} : vector<1x128xf32> to vector<1x32xf32>
    %193 = vector.extract_strided_slice %191 {offsets = [0, 0], sizes = [1, 32], strides = [1, 1]} : vector<1x128xf32> to vector<1x32xf32>
    %194 = arith.addf %192, %193 : vector<1x32xf32>
    %195 = arith.negf %194 : vector<1x32xf32>
    %196 = math.exp %195 : vector<1x32xf32>
    %cst_39 = arith.constant 1.000000e+00 : f32
    %197 = vector.broadcast %cst_39 : f32 to vector<1x32xf32>
    %198 = arith.addf %197, %196 : vector<1x32xf32>
    %199 = arith.divf %197, %198 : vector<1x32xf32>
    %200 = vector.extract_strided_slice %190 {offsets = [0, 32], sizes = [1, 32], strides = [1, 1]} : vector<1x128xf32> to vector<1x32xf32>
    %201 = vector.extract_strided_slice %191 {offsets = [0, 32], sizes = [1, 32], strides = [1, 1]} : vector<1x128xf32> to vector<1x32xf32>
    %202 = arith.addf %200, %201 : vector<1x32xf32>
    %203 = arith.negf %202 : vector<1x32xf32>
    %204 = math.exp %203 : vector<1x32xf32>
    %cst_40 = arith.constant 1.000000e+00 : f32
    %205 = vector.broadcast %cst_40 : f32 to vector<1x32xf32>
    %206 = arith.addf %205, %204 : vector<1x32xf32>
    %207 = arith.divf %205, %206 : vector<1x32xf32>
    %208 = vector.extract_strided_slice %190 {offsets = [0, 64], sizes = [1, 32], strides = [1, 1]} : vector<1x128xf32> to vector<1x32xf32>
    %209 = vector.extract_strided_slice %191 {offsets = [0, 64], sizes = [1, 32], strides = [1, 1]} : vector<1x128xf32> to vector<1x32xf32>
    %210 = arith.addf %209, %7 : vector<1x32xf32>
    %211 = arith.mulf %199, %210 : vector<1x32xf32>
    %212 = arith.addf %208, %211 : vector<1x32xf32>
    %213 = math.tanh %212 : vector<1x32xf32>
    %cst_41 = arith.constant 1.000000e+00 : f32
    %214 = vector.broadcast %cst_41 : f32 to vector<1x32xf32>
    %215 = arith.subf %214, %207 : vector<1x32xf32>
    %216 = arith.mulf %215, %213 : vector<1x32xf32>
    %217 = arith.mulf %207, %189 : vector<1x32xf32>
    %218 = arith.addf %216, %217 : vector<1x32xf32>
    %219 = vector.extract_strided_slice %14 {offsets = [7, 0], sizes = [1, 128], strides = [1, 1]} : vector<8x128xf32> to vector<1x128xf32>
    %cst_42 = arith.constant dense<0.000000e+00> : vector<1x128xf32>
    %220 = tpu.matmul %218, %1, %cst_42 {dimension_numbers = #tpu.dot_dimension_numbers<[1], [0], [0], [1], [0, 0, 1, 1], [], []>} : vector<1x32xf32>, vector<32x128xf32>, vector<1x128xf32> -> vector<1x128xf32>
    %221 = vector.extract_strided_slice %219 {offsets = [0, 0], sizes = [1, 32], strides = [1, 1]} : vector<1x128xf32> to vector<1x32xf32>
    %222 = vector.extract_strided_slice %220 {offsets = [0, 0], sizes = [1, 32], strides = [1, 1]} : vector<1x128xf32> to vector<1x32xf32>
    %223 = arith.addf %221, %222 : vector<1x32xf32>
    %224 = arith.negf %223 : vector<1x32xf32>
    %225 = math.exp %224 : vector<1x32xf32>
    %cst_43 = arith.constant 1.000000e+00 : f32
    %226 = vector.broadcast %cst_43 : f32 to vector<1x32xf32>
    %227 = arith.addf %226, %225 : vector<1x32xf32>
    %228 = arith.divf %226, %227 : vector<1x32xf32>
    %229 = vector.extract_strided_slice %219 {offsets = [0, 32], sizes = [1, 32], strides = [1, 1]} : vector<1x128xf32> to vector<1x32xf32>
    %230 = vector.extract_strided_slice %220 {offsets = [0, 32], sizes = [1, 32], strides = [1, 1]} : vector<1x128xf32> to vector<1x32xf32>
    %231 = arith.addf %229, %230 : vector<1x32xf32>
    %232 = arith.negf %231 : vector<1x32xf32>
    %233 = math.exp %232 : vector<1x32xf32>
    %cst_44 = arith.constant 1.000000e+00 : f32
    %234 = vector.broadcast %cst_44 : f32 to vector<1x32xf32>
    %235 = arith.addf %234, %233 : vector<1x32xf32>
    %236 = arith.divf %234, %235 : vector<1x32xf32>
    %237 = vector.extract_strided_slice %219 {offsets = [0, 64], sizes = [1, 32], strides = [1, 1]} : vector<1x128xf32> to vector<1x32xf32>
    %238 = vector.extract_strided_slice %220 {offsets = [0, 64], sizes = [1, 32], strides = [1, 1]} : vector<1x128xf32> to vector<1x32xf32>
    %239 = arith.addf %238, %7 : vector<1x32xf32>
    %240 = arith.mulf %228, %239 : vector<1x32xf32>
    %241 = arith.addf %237, %240 : vector<1x32xf32>
    %242 = math.tanh %241 : vector<1x32xf32>
    %cst_45 = arith.constant 1.000000e+00 : f32
    %243 = vector.broadcast %cst_45 : f32 to vector<1x32xf32>
    %244 = arith.subf %243, %236 : vector<1x32xf32>
    %245 = arith.mulf %244, %242 : vector<1x32xf32>
    %246 = arith.mulf %236, %218 : vector<1x32xf32>
    %247 = arith.addf %245, %246 : vector<1x32xf32>
    %248 = tpu.concatenate %44, %73, %102, %131, %160, %189, %218, %247 in 0 : vector<1x32xf32>, vector<1x32xf32>, vector<1x32xf32>, vector<1x32xf32>, vector<1x32xf32>, vector<1x32xf32>, vector<1x32xf32>, vector<1x32xf32> -> vector<8x32xf32>
    %c0_46 = arith.constant 0 : index
    %c0_47 = arith.constant 0 : index
    %249 = vector.load %arg3[%c0_46, %c0_47] : memref<8x32xf32, #tpu.memory_space<vmem>>, vector<8x32xf32>
    tpu.vector_store %arg3[%c0_46, %c0_47], %248 {strides = array<i32>} : memref<8x32xf32, #tpu.memory_space<vmem>>, vector<8x32xf32>,
    %cst_48 = arith.constant dense<0.000000e+00> : vector<32xf32>
    %250 = vector.multi_reduction <add>, %248, %cst_48 [0] : vector<8x32xf32> to vector<32xf32>
    %251 = vector.shape_cast %250 : vector<32xf32> to vector<1x32xf32>
    %cst_49 = arith.constant 8.000000e+00 : f32
    %252 = vector.broadcast %cst_49 : f32 to vector<1x32xf32>
    %253 = arith.divf %251, %252 : vector<1x32xf32>
    %c0_50 = arith.constant 0 : index
    %c0_51 = arith.constant 0 : index
    %254 = vector.load %arg4[%c0_50, %c0_51] : memref<1x32xf32, #tpu.memory_space<vmem>>, vector<1x32xf32>
    tpu.vector_store %arg4[%c0_50, %c0_51], %253 {strides = array<i32>} : memref<1x32xf32, #tpu.memory_space<vmem>>, vector<1x32xf32>,
    %cst_52 = arith.constant dense<0.000000e+00> : vector<1x128xf32>
    %255 = tpu.matmul %247, %2, %cst_52 {dimension_numbers = #tpu.dot_dimension_numbers<[1], [0], [0], [1], [0, 0, 1, 1], [], []>} : vector<1x32xf32>, vector<32x128xf32>, vector<1x128xf32> -> vector<1x128xf32>
    %256 = arith.addf %255, %8 : vector<1x128xf32>
    %257 = vector.extract_strided_slice %256 {offsets = [0, 0], sizes = [1, 32], strides = [1, 1]} : vector<1x128xf32> to vector<1x32xf32>
    %258 = arith.negf %257 : vector<1x32xf32>
    %259 = math.exp %258 : vector<1x32xf32>
    %cst_53 = arith.constant 1.000000e+00 : f32
    %260 = vector.broadcast %cst_53 : f32 to vector<1x32xf32>
    %261 = arith.addf %260, %259 : vector<1x32xf32>
    %262 = arith.divf %260, %261 : vector<1x32xf32>
    %263 = vector.extract_strided_slice %256 {offsets = [0, 32], sizes = [1, 32], strides = [1, 1]} : vector<1x128xf32> to vector<1x32xf32>
    %264 = arith.negf %263 : vector<1x32xf32>
    %265 = math.exp %264 : vector<1x32xf32>
    %cst_54 = arith.constant 1.000000e+00 : f32
    %266 = vector.broadcast %cst_54 : f32 to vector<1x32xf32>
    %267 = arith.addf %266, %265 : vector<1x32xf32>
    %268 = arith.divf %266, %267 : vector<1x32xf32>
    %269 = vector.extract_strided_slice %256 {offsets = [0, 64], sizes = [1, 32], strides = [1, 1]} : vector<1x128xf32> to vector<1x32xf32>
    %270 = vector.extract_strided_slice %256 {offsets = [0, 96], sizes = [1, 32], strides = [1, 1]} : vector<1x128xf32> to vector<1x32xf32>
    %271 = arith.mulf %262, %270 : vector<1x32xf32>
    %272 = arith.addf %269, %271 : vector<1x32xf32>
    %273 = math.tanh %272 : vector<1x32xf32>
    %cst_55 = arith.constant 1.000000e+00 : f32
    %274 = vector.broadcast %cst_55 : f32 to vector<1x32xf32>
    %275 = arith.subf %274, %268 : vector<1x32xf32>
    %276 = arith.mulf %275, %273 : vector<1x32xf32>
    %277 = arith.mulf %268, %247 : vector<1x32xf32>
    %278 = arith.addf %276, %277 : vector<1x32xf32>
    %cst_56 = arith.constant dense<0.000000e+00> : vector<1x128xf32>
    %279 = tpu.matmul %278, %3, %cst_56 {dimension_numbers = #tpu.dot_dimension_numbers<[1], [0], [0], [1], [0, 0, 1, 1], [], []>} : vector<1x32xf32>, vector<32x128xf32>, vector<1x128xf32> -> vector<1x128xf32>
    %280 = arith.addf %279, %9 : vector<1x128xf32>
    %281 = vector.extract_strided_slice %280 {offsets = [0, 0], sizes = [1, 32], strides = [1, 1]} : vector<1x128xf32> to vector<1x32xf32>
    %282 = arith.negf %281 : vector<1x32xf32>
    %283 = math.exp %282 : vector<1x32xf32>
    %cst_57 = arith.constant 1.000000e+00 : f32
    %284 = vector.broadcast %cst_57 : f32 to vector<1x32xf32>
    %285 = arith.addf %284, %283 : vector<1x32xf32>
    %286 = arith.divf %284, %285 : vector<1x32xf32>
    %287 = vector.extract_strided_slice %280 {offsets = [0, 32], sizes = [1, 32], strides = [1, 1]} : vector<1x128xf32> to vector<1x32xf32>
    %288 = arith.negf %287 : vector<1x32xf32>
    %289 = math.exp %288 : vector<1x32xf32>
    %cst_58 = arith.constant 1.000000e+00 : f32
    %290 = vector.broadcast %cst_58 : f32 to vector<1x32xf32>
    %291 = arith.addf %290, %289 : vector<1x32xf32>
    %292 = arith.divf %290, %291 : vector<1x32xf32>
    %293 = vector.extract_strided_slice %280 {offsets = [0, 64], sizes = [1, 32], strides = [1, 1]} : vector<1x128xf32> to vector<1x32xf32>
    %294 = vector.extract_strided_slice %280 {offsets = [0, 96], sizes = [1, 32], strides = [1, 1]} : vector<1x128xf32> to vector<1x32xf32>
    %295 = arith.mulf %286, %294 : vector<1x32xf32>
    %296 = arith.addf %293, %295 : vector<1x32xf32>
    %297 = math.tanh %296 : vector<1x32xf32>
    %cst_59 = arith.constant 1.000000e+00 : f32
    %298 = vector.broadcast %cst_59 : f32 to vector<1x32xf32>
    %299 = arith.subf %298, %292 : vector<1x32xf32>
    %300 = arith.mulf %299, %297 : vector<1x32xf32>
    %301 = arith.mulf %292, %278 : vector<1x32xf32>
    %302 = arith.addf %300, %301 : vector<1x32xf32>
    %cst_60 = arith.constant dense<0.000000e+00> : vector<1x128xf32>
    %303 = tpu.matmul %302, %3, %cst_60 {dimension_numbers = #tpu.dot_dimension_numbers<[1], [0], [0], [1], [0, 0, 1, 1], [], []>} : vector<1x32xf32>, vector<32x128xf32>, vector<1x128xf32> -> vector<1x128xf32>
    %304 = arith.addf %303, %9 : vector<1x128xf32>
    %305 = vector.extract_strided_slice %304 {offsets = [0, 0], sizes = [1, 32], strides = [1, 1]} : vector<1x128xf32> to vector<1x32xf32>
    %306 = arith.negf %305 : vector<1x32xf32>
    %307 = math.exp %306 : vector<1x32xf32>
    %cst_61 = arith.constant 1.000000e+00 : f32
    %308 = vector.broadcast %cst_61 : f32 to vector<1x32xf32>
    %309 = arith.addf %308, %307 : vector<1x32xf32>
    %310 = arith.divf %308, %309 : vector<1x32xf32>
    %311 = vector.extract_strided_slice %304 {offsets = [0, 32], sizes = [1, 32], strides = [1, 1]} : vector<1x128xf32> to vector<1x32xf32>
    %312 = arith.negf %311 : vector<1x32xf32>
    %313 = math.exp %312 : vector<1x32xf32>
    %cst_62 = arith.constant 1.000000e+00 : f32
    %314 = vector.broadcast %cst_62 : f32 to vector<1x32xf32>
    %315 = arith.addf %314, %313 : vector<1x32xf32>
    %316 = arith.divf %314, %315 : vector<1x32xf32>
    %317 = vector.extract_strided_slice %304 {offsets = [0, 64], sizes = [1, 32], strides = [1, 1]} : vector<1x128xf32> to vector<1x32xf32>
    %318 = vector.extract_strided_slice %304 {offsets = [0, 96], sizes = [1, 32], strides = [1, 1]} : vector<1x128xf32> to vector<1x32xf32>
    %319 = arith.mulf %310, %318 : vector<1x32xf32>
    %320 = arith.addf %317, %319 : vector<1x32xf32>
    %321 = math.tanh %320 : vector<1x32xf32>
    %cst_63 = arith.constant 1.000000e+00 : f32
    %322 = vector.broadcast %cst_63 : f32 to vector<1x32xf32>
    %323 = arith.subf %322, %316 : vector<1x32xf32>
    %324 = arith.mulf %323, %321 : vector<1x32xf32>
    %325 = arith.mulf %316, %302 : vector<1x32xf32>
    %326 = arith.addf %324, %325 : vector<1x32xf32>
    %cst_64 = arith.constant dense<0.000000e+00> : vector<1x128xf32>
    %327 = tpu.matmul %326, %3, %cst_64 {dimension_numbers = #tpu.dot_dimension_numbers<[1], [0], [0], [1], [0, 0, 1, 1], [], []>} : vector<1x32xf32>, vector<32x128xf32>, vector<1x128xf32> -> vector<1x128xf32>
    %328 = arith.addf %327, %9 : vector<1x128xf32>
    %329 = vector.extract_strided_slice %328 {offsets = [0, 0], sizes = [1, 32], strides = [1, 1]} : vector<1x128xf32> to vector<1x32xf32>
    %330 = arith.negf %329 : vector<1x32xf32>
    %331 = math.exp %330 : vector<1x32xf32>
    %cst_65 = arith.constant 1.000000e+00 : f32
    %332 = vector.broadcast %cst_65 : f32 to vector<1x32xf32>
    %333 = arith.addf %332, %331 : vector<1x32xf32>
    %334 = arith.divf %332, %333 : vector<1x32xf32>
    %335 = vector.extract_strided_slice %328 {offsets = [0, 32], sizes = [1, 32], strides = [1, 1]} : vector<1x128xf32> to vector<1x32xf32>
    %336 = arith.negf %335 : vector<1x32xf32>
    %337 = math.exp %336 : vector<1x32xf32>
    %cst_66 = arith.constant 1.000000e+00 : f32
    %338 = vector.broadcast %cst_66 : f32 to vector<1x32xf32>
    %339 = arith.addf %338, %337 : vector<1x32xf32>
    %340 = arith.divf %338, %339 : vector<1x32xf32>
    %341 = vector.extract_strided_slice %328 {offsets = [0, 64], sizes = [1, 32], strides = [1, 1]} : vector<1x128xf32> to vector<1x32xf32>
    %342 = vector.extract_strided_slice %328 {offsets = [0, 96], sizes = [1, 32], strides = [1, 1]} : vector<1x128xf32> to vector<1x32xf32>
    %343 = arith.mulf %334, %342 : vector<1x32xf32>
    %344 = arith.addf %341, %343 : vector<1x32xf32>
    %345 = math.tanh %344 : vector<1x32xf32>
    %cst_67 = arith.constant 1.000000e+00 : f32
    %346 = vector.broadcast %cst_67 : f32 to vector<1x32xf32>
    %347 = arith.subf %346, %340 : vector<1x32xf32>
    %348 = arith.mulf %347, %345 : vector<1x32xf32>
    %349 = arith.mulf %340, %326 : vector<1x32xf32>
    %350 = arith.addf %348, %349 : vector<1x32xf32>
    %cst_68 = arith.constant dense<0.000000e+00> : vector<1x128xf32>
    %351 = tpu.matmul %350, %3, %cst_68 {dimension_numbers = #tpu.dot_dimension_numbers<[1], [0], [0], [1], [0, 0, 1, 1], [], []>} : vector<1x32xf32>, vector<32x128xf32>, vector<1x128xf32> -> vector<1x128xf32>
    %352 = arith.addf %351, %9 : vector<1x128xf32>
    %353 = vector.extract_strided_slice %352 {offsets = [0, 0], sizes = [1, 32], strides = [1, 1]} : vector<1x128xf32> to vector<1x32xf32>
    %354 = arith.negf %353 : vector<1x32xf32>
    %355 = math.exp %354 : vector<1x32xf32>
    %cst_69 = arith.constant 1.000000e+00 : f32
    %356 = vector.broadcast %cst_69 : f32 to vector<1x32xf32>
    %357 = arith.addf %356, %355 : vector<1x32xf32>
    %358 = arith.divf %356, %357 : vector<1x32xf32>
    %359 = vector.extract_strided_slice %352 {offsets = [0, 32], sizes = [1, 32], strides = [1, 1]} : vector<1x128xf32> to vector<1x32xf32>
    %360 = arith.negf %359 : vector<1x32xf32>
    %361 = math.exp %360 : vector<1x32xf32>
    %cst_70 = arith.constant 1.000000e+00 : f32
    %362 = vector.broadcast %cst_70 : f32 to vector<1x32xf32>
    %363 = arith.addf %362, %361 : vector<1x32xf32>
    %364 = arith.divf %362, %363 : vector<1x32xf32>
    %365 = vector.extract_strided_slice %352 {offsets = [0, 64], sizes = [1, 32], strides = [1, 1]} : vector<1x128xf32> to vector<1x32xf32>
    %366 = vector.extract_strided_slice %352 {offsets = [0, 96], sizes = [1, 32], strides = [1, 1]} : vector<1x128xf32> to vector<1x32xf32>
    %367 = arith.mulf %358, %366 : vector<1x32xf32>
    %368 = arith.addf %365, %367 : vector<1x32xf32>
    %369 = math.tanh %368 : vector<1x32xf32>
    %cst_71 = arith.constant 1.000000e+00 : f32
    %370 = vector.broadcast %cst_71 : f32 to vector<1x32xf32>
    %371 = arith.subf %370, %364 : vector<1x32xf32>
    %372 = arith.mulf %371, %369 : vector<1x32xf32>
    %373 = arith.mulf %364, %350 : vector<1x32xf32>
    %374 = arith.addf %372, %373 : vector<1x32xf32>
    %cst_72 = arith.constant dense<0.000000e+00> : vector<1x128xf32>
    %375 = tpu.matmul %374, %3, %cst_72 {dimension_numbers = #tpu.dot_dimension_numbers<[1], [0], [0], [1], [0, 0, 1, 1], [], []>} : vector<1x32xf32>, vector<32x128xf32>, vector<1x128xf32> -> vector<1x128xf32>
    %376 = arith.addf %375, %9 : vector<1x128xf32>
    %377 = vector.extract_strided_slice %376 {offsets = [0, 0], sizes = [1, 32], strides = [1, 1]} : vector<1x128xf32> to vector<1x32xf32>
    %378 = arith.negf %377 : vector<1x32xf32>
    %379 = math.exp %378 : vector<1x32xf32>
    %cst_73 = arith.constant 1.000000e+00 : f32
    %380 = vector.broadcast %cst_73 : f32 to vector<1x32xf32>
    %381 = arith.addf %380, %379 : vector<1x32xf32>
    %382 = arith.divf %380, %381 : vector<1x32xf32>
    %383 = vector.extract_strided_slice %376 {offsets = [0, 32], sizes = [1, 32], strides = [1, 1]} : vector<1x128xf32> to vector<1x32xf32>
    %384 = arith.negf %383 : vector<1x32xf32>
    %385 = math.exp %384 : vector<1x32xf32>
    %cst_74 = arith.constant 1.000000e+00 : f32
    %386 = vector.broadcast %cst_74 : f32 to vector<1x32xf32>
    %387 = arith.addf %386, %385 : vector<1x32xf32>
    %388 = arith.divf %386, %387 : vector<1x32xf32>
    %389 = vector.extract_strided_slice %376 {offsets = [0, 64], sizes = [1, 32], strides = [1, 1]} : vector<1x128xf32> to vector<1x32xf32>
    %390 = vector.extract_strided_slice %376 {offsets = [0, 96], sizes = [1, 32], strides = [1, 1]} : vector<1x128xf32> to vector<1x32xf32>
    %391 = arith.mulf %382, %390 : vector<1x32xf32>
    %392 = arith.addf %389, %391 : vector<1x32xf32>
    %393 = math.tanh %392 : vector<1x32xf32>
    %cst_75 = arith.constant 1.000000e+00 : f32
    %394 = vector.broadcast %cst_75 : f32 to vector<1x32xf32>
    %395 = arith.subf %394, %388 : vector<1x32xf32>
    %396 = arith.mulf %395, %393 : vector<1x32xf32>
    %397 = arith.mulf %388, %374 : vector<1x32xf32>
    %398 = arith.addf %396, %397 : vector<1x32xf32>
    %cst_76 = arith.constant dense<0.000000e+00> : vector<1x128xf32>
    %399 = tpu.matmul %398, %3, %cst_76 {dimension_numbers = #tpu.dot_dimension_numbers<[1], [0], [0], [1], [0, 0, 1, 1], [], []>} : vector<1x32xf32>, vector<32x128xf32>, vector<1x128xf32> -> vector<1x128xf32>
    %400 = arith.addf %399, %9 : vector<1x128xf32>
    %401 = vector.extract_strided_slice %400 {offsets = [0, 0], sizes = [1, 32], strides = [1, 1]} : vector<1x128xf32> to vector<1x32xf32>
    %402 = arith.negf %401 : vector<1x32xf32>
    %403 = math.exp %402 : vector<1x32xf32>
    %cst_77 = arith.constant 1.000000e+00 : f32
    %404 = vector.broadcast %cst_77 : f32 to vector<1x32xf32>
    %405 = arith.addf %404, %403 : vector<1x32xf32>
    %406 = arith.divf %404, %405 : vector<1x32xf32>
    %407 = vector.extract_strided_slice %400 {offsets = [0, 32], sizes = [1, 32], strides = [1, 1]} : vector<1x128xf32> to vector<1x32xf32>
    %408 = arith.negf %407 : vector<1x32xf32>
    %409 = math.exp %408 : vector<1x32xf32>
    %cst_78 = arith.constant 1.000000e+00 : f32
    %410 = vector.broadcast %cst_78 : f32 to vector<1x32xf32>
    %411 = arith.addf %410, %409 : vector<1x32xf32>
    %412 = arith.divf %410, %411 : vector<1x32xf32>
    %413 = vector.extract_strided_slice %400 {offsets = [0, 64], sizes = [1, 32], strides = [1, 1]} : vector<1x128xf32> to vector<1x32xf32>
    %414 = vector.extract_strided_slice %400 {offsets = [0, 96], sizes = [1, 32], strides = [1, 1]} : vector<1x128xf32> to vector<1x32xf32>
    %415 = arith.mulf %406, %414 : vector<1x32xf32>
    %416 = arith.addf %413, %415 : vector<1x32xf32>
    %417 = math.tanh %416 : vector<1x32xf32>
    %cst_79 = arith.constant 1.000000e+00 : f32
    %418 = vector.broadcast %cst_79 : f32 to vector<1x32xf32>
    %419 = arith.subf %418, %412 : vector<1x32xf32>
    %420 = arith.mulf %419, %417 : vector<1x32xf32>
    %421 = arith.mulf %412, %398 : vector<1x32xf32>
    %422 = arith.addf %420, %421 : vector<1x32xf32>
    %cst_80 = arith.constant dense<0.000000e+00> : vector<1x128xf32>
    %423 = tpu.matmul %422, %3, %cst_80 {dimension_numbers = #tpu.dot_dimension_numbers<[1], [0], [0], [1], [0, 0, 1, 1], [], []>} : vector<1x32xf32>, vector<32x128xf32>, vector<1x128xf32> -> vector<1x128xf32>
    %424 = arith.addf %423, %9 : vector<1x128xf32>
    %425 = vector.extract_strided_slice %424 {offsets = [0, 0], sizes = [1, 32], strides = [1, 1]} : vector<1x128xf32> to vector<1x32xf32>
    %426 = arith.negf %425 : vector<1x32xf32>
    %427 = math.exp %426 : vector<1x32xf32>
    %cst_81 = arith.constant 1.000000e+00 : f32
    %428 = vector.broadcast %cst_81 : f32 to vector<1x32xf32>
    %429 = arith.addf %428, %427 : vector<1x32xf32>
    %430 = arith.divf %428, %429 : vector<1x32xf32>
    %431 = vector.extract_strided_slice %424 {offsets = [0, 32], sizes = [1, 32], strides = [1, 1]} : vector<1x128xf32> to vector<1x32xf32>
    %432 = arith.negf %431 : vector<1x32xf32>
    %433 = math.exp %432 : vector<1x32xf32>
    %cst_82 = arith.constant 1.000000e+00 : f32
    %434 = vector.broadcast %cst_82 : f32 to vector<1x32xf32>
    %435 = arith.addf %434, %433 : vector<1x32xf32>
    %436 = arith.divf %434, %435 : vector<1x32xf32>
    %437 = vector.extract_strided_slice %424 {offsets = [0, 64], sizes = [1, 32], strides = [1, 1]} : vector<1x128xf32> to vector<1x32xf32>
    %438 = vector.extract_strided_slice %424 {offsets = [0, 96], sizes = [1, 32], strides = [1, 1]} : vector<1x128xf32> to vector<1x32xf32>
    %439 = arith.mulf %430, %438 : vector<1x32xf32>
    %440 = arith.addf %437, %439 : vector<1x32xf32>
    %441 = math.tanh %440 : vector<1x32xf32>
    %cst_83 = arith.constant 1.000000e+00 : f32
    %442 = vector.broadcast %cst_83 : f32 to vector<1x32xf32>
    %443 = arith.subf %442, %436 : vector<1x32xf32>
    %444 = arith.mulf %443, %441 : vector<1x32xf32>
    %445 = arith.mulf %436, %422 : vector<1x32xf32>
    %446 = arith.addf %444, %445 : vector<1x32xf32>
    %447 = tpu.concatenate %446, %422, %398, %374, %350, %326, %302, %278 in 0 : vector<1x32xf32>, vector<1x32xf32>, vector<1x32xf32>, vector<1x32xf32>, vector<1x32xf32>, vector<1x32xf32>, vector<1x32xf32>, vector<1x32xf32> -> vector<8x32xf32>
    %cst_84 = arith.constant dense<0.000000e+00> : vector<8x128xf32>
    %448 = tpu.matmul %447, %4, %cst_84 {dimension_numbers = #tpu.dot_dimension_numbers<[1], [0], [0], [1], [0, 0, 1, 1], [], []>} : vector<8x32xf32>, vector<32x128xf32>, vector<8x128xf32> -> vector<8x128xf32>
    %449 = vector.broadcast %10 : vector<1x128xf32> to vector<8x128xf32>
    %450 = arith.addf %448, %449 : vector<8x128xf32>
    %c0_85 = arith.constant 0 : index
    %c0_86 = arith.constant 0 : index
    %451 = vector.load %arg0[%c0_85, %c0_86] : memref<8x128xf32, #tpu.memory_space<vmem>>, vector<8x128xf32>
    %452 = arith.subf %450, %451 : vector<8x128xf32>
    %453 = arith.mulf %452, %452 : vector<8x128xf32>
    %cst_87 = arith.constant dense<0.000000e+00> : vector<8xf32>
    %454 = vector.multi_reduction <add>, %453, %cst_87 [1] : vector<8x128xf32> to vector<8xf32>
    %455 = vector.shape_cast %454 : vector<8xf32> to vector<8x1xf32>
    %cst_88 = arith.constant dense<0.000000e+00> : vector<1xf32>
    %456 = vector.multi_reduction <add>, %455, %cst_88 [0] : vector<8x1xf32> to vector<1xf32>
    %457 = vector.shape_cast %456 : vector<1xf32> to vector<1x1xf32>
    %cst_89 = arith.constant 0.0018382353 : f32
    %458 = vector.broadcast %cst_89 : f32 to vector<1x1xf32>
    %459 = arith.mulf %457, %458 : vector<1x1xf32>
    %c0_90 = arith.constant 0 : index
    %c0_91 = arith.constant 0 : index
    %460 = vector.load %arg5[%c0_90, %c0_91] : memref<1x1xf32, #tpu.memory_space<vmem>>, vector<1x1xf32>
    tpu.vector_store %arg5[%c0_90, %c0_91], %459 {strides = array<i32>} : memref<1x1xf32, #tpu.memory_space<vmem>>, vector<1x1xf32>,
    return
  }
}

</mosaic_0001>

<llo_original>
// kernel: lstm_autoencoder_forward.1
$region0: #{lstm_autoencoder_forward.1}
  #allocation0 [shape = 'u32[]', space=smem, size = 0x4, offset = 0x4, fixed_abs, tag = 'smem constant byte address 0x4 - core index']
  #allocation1 [shape = 'u32[144,128]{1,0:T(1,128)}', space=vmem, size = 0x12000, scoped, tag = 'internal scratch']
  %s0 = inlined_call_operand.vmem [shape: f32[8,128], index: 0, kind: input, shape index: {}]
  %s1 = inlined_call_operand.hbm [shape: f32[256,128], index: 1, kind: input, shape index: {}]
  %s2 = inlined_call_operand.vmem [shape: f32[8,128], index: 2, kind: input, shape index: {}]
  %s3 = inlined_call_operand.hbm [shape: f32[8,32], index: 3, kind: output, shape index: {0}]
  %s4 = inlined_call_operand.hbm [shape: f32[1,32], index: 4, kind: output, shape index: {1}]
  %s5 = inlined_call_operand.hbm [shape: f32[1,1], index: 5, kind: output, shape index: {2}]
  %6 = xla_tuple %s3, %s4, %s5
  %s7 = sld [smem:[#allocation0]]
  $region42: #{lstm_autoencoder_forward.1} parent=0
    _
  %s9 = ssub.s32 1, %s7
  %s10 = scalar_select 0, %s9, %s7
  $region1: #{lstm_autoencoder_forward.1} parent=0
    #allocation2 [shape = 'u8[131072]{0}', space=vmem, size = 0x20000, scoped, tag = 'input window, operand 1, single buffered']
    #allocation3 [shape = 's32[1]{0}', space=sflag, size = 0x4, scoped, tag = 'scoped memory for lstm_autoencoder_forward.1']
    #allocation4 [shape = 's32[1]{0}', space=sflag, size = 0x4, scoped, tag = 'scoped memory for lstm_autoencoder_forward.1']
    #allocation5 [shape = 'u8[4096]{0}', space=vmem, size = 0x1000, scoped, tag = 'output window, operand 0, single buffered']
    #allocation6 [shape = 'u8[512]{0}', space=vmem, size = 0x400, scoped, tag = 'output window, operand 1, single buffered']
    #allocation7 [shape = 's32[1]{0}', space=sflag, size = 0x4, scoped, tag = 'scoped memory for lstm_autoencoder_forward.1']
    #allocation8 [shape = 'u8[512]{0}', space=vmem, size = 0x400, scoped, tag = 'output window, operand 2, single buffered']
    %11 = vsyncpa [#allocation3], 0
    %12 = vsyncpa [#allocation4], 0
    %13 = vsyncpa [#allocation7], 0
    // Predicated region
    $region2: #{lstm_autoencoder_forward.1} parent=1 // pred_check
      _
    $region3: #{lstm_autoencoder_forward.1} parent=1 // pred_check_branch
      %15 = sbr.rel (0) target = $region5
    $region4: #{lstm_autoencoder_forward.1} parent=1 // pred_region
      _
    $region5: #{lstm_autoencoder_forward.1} parent=1 // pred_fallthru
      _
    // Predicated region
    $region6: #{lstm_autoencoder_forward.1} parent=1 // pred_check
      _
    $region7: #{lstm_autoencoder_forward.1} parent=1 // pred_check_branch
      %17 = sbr.rel (0) target = $region9
    $region8: #{lstm_autoencoder_forward.1} parent=1 // pred_region
      %s19 = ssub.s32 4096, 4096
      %20 = vsyncadd [#allocation3], %s19
      %s21 = sshll.u32 [#allocation2], 4
      %s22 = int_to_ptr.vmem [resolvable:$true] %s21
      %27 = dma.hbm_to_vmem [thread:$0]  %s1, 4096, %s22, [#allocation3], 128, 128, 8
    $region9: #{lstm_autoencoder_forward.1} parent=1 // pred_fallthru
      _
    // Predicated region
    $region10: #{lstm_autoencoder_forward.1} parent=1 // pred_check
      _
    $region11: #{lstm_autoencoder_forward.1} parent=1 // pred_check_branch
      %29 = sbr.rel (0) target = $region13
    $region12: #{lstm_autoencoder_forward.1} parent=1 // pred_region
      _
    $region13: #{lstm_autoencoder_forward.1} parent=1 // pred_fallthru
      _
    // Predicated region
    $region14: #{lstm_autoencoder_forward.1} parent=1 // pred_check
      _
    $region15: #{lstm_autoencoder_forward.1} parent=1 // pred_check_branch
      %31 = sbr.rel (0) target = $region17
    $region16: #{lstm_autoencoder_forward.1} parent=1 // pred_region
      %32 = dma.done [#allocation3], 4096
    $region17: #{lstm_autoencoder_forward.1} parent=1 // pred_fallthru
      _
    %v33 = vld [vmem:[#allocation2] sm:$0xff]
    %v34 = vld [vmem:[#allocation2 + $0x8] sm:$0xff]
    %v35 = vld [vmem:[#allocation2 + $0x10] sm:$0xff]
    %v36 = vld [vmem:[#allocation2 + $0x18] sm:$0xff]
    %v37 = vld [vmem:[#allocation2 + $0x20] sm:$0xff]
    %v38 = vld [vmem:[#allocation2 + $0x28] sm:$0xff]
    %v39 = vld [vmem:[#allocation2 + $0x30] sm:$0xff]
    %v40 = vld [vmem:[#allocation2 + $0x38] sm:$0xff]
    %v41 = vld [vmem:[#allocation2 + $0x40] sm:$0xff]
    %v42 = vld [vmem:[#allocation2 + $0x48] sm:$0xff]
    %v43 = vld [vmem:[#allocation2 + $0x50] sm:$0xff]
    %v44 = vld [vmem:[#allocation2 + $0x58] sm:$0xff]
    %v45 = vld [vmem:[#allocation2 + $0x60] sm:$0xff]
    %v46 = vld [vmem:[#allocation2 + $0x68] sm:$0xff]
    %v47 = vld [vmem:[#allocation2 + $0x70] sm:$0xff]
    %v48 = vld [vmem:[#allocation2 + $0x78] sm:$0xff]
    %v49 = vld [vmem:[#allocation2 + $0x80] sm:$0xff]
    %v50 = vld [vmem:[#allocation2 + $0x88] sm:$0xff]
    %v51 = vld [vmem:[#allocation2 + $0x90] sm:$0xff]
    %v52 = vld [vmem:[#allocation2 + $0x98] sm:$0xff]
    %v53 = vld [vmem:[#allocation2 + $0xa0] sm:$0xff]
    %v54 = vld [vmem:[#allocation2 + $0xa8] sm:$0xff]
    %v55 = vld [vmem:[#allocation2 + $0xb0] sm:$0xff]
    %v56 = vld [vmem:[#allocation2 + $0xb8] sm:$0xff]
    %v57 = vld [vmem:[#allocation2 + $0xc0] sm:$0xff]
    %v58 = vld [vmem:[#allocation2 + $0xc8] sm:$0xff]
    %v59 = vld [vmem:[#allocation2 + $0xd0] sm:$0xff]
    %v60 = vld [vmem:[#allocation2 + $0xd8] sm:$0xff]
    %v61 = vld [vmem:[#allocation2 + $0xe0] sm:$0xff]
    %v62 = vld [vmem:[#allocation2 + $0xe8] sm:$0xff]
    %v63 = vld [vmem:[#allocation2 + $0xf0] sm:$0xff]
    %v64 = vld [vmem:[#allocation2 + $0xf8] sm:$0xff]
    %v65 = vld [vmem:[%s2] sm:$0x1]
    %v66 = vld [vmem:[%s2 + $0x1] sm:$0x1]
    %v67 = vld [vmem:[%s2 + $0x2] sm:$0x1]
    %v68 = vld [vmem:[%s2 + $0x3] sm:$0x1]
    %v69 = vld [vmem:[%s2 + $0x4] sm:$0x1]
    %v70 = vld [vmem:[%s0] sm:$0xff]
    %v71 = vlaneseq
    %v72 = vshrl.u32 %v71, 7
    %v73 = vsub.s32 0, %v72
    %v74 = vrot.slane %v65, %v73
    %75 = vmatprep.subr.mxu0 0.0
    %76 = vmatpush1.msra.mxu0 %v33
    %77 = vmatprep.subr.mxu0 0.0
    %78 = vmatpush1.msra.mxu0 %v34
    %79 = vmatprep.subr.mxu0 0.0
    %80 = vmatpush1.msra.mxu0 %v35
    %81 = vmatprep.subr.mxu0 0.0
    %82 = vmatpush1.msra.mxu0 %v36
    %83 = vmatprep.subr.mxu0 0.0
    %84 = vmatpush1.msra.mxu0 %v37
    %85 = vmatprep.subr.mxu0 0.0
    %86 = vmatpush1.msra.mxu0 %v38
    %87 = vmatprep.subr.mxu0 0.0
    %88 = vmatpush1.msra.mxu0 %v39
    %89 = vmatprep.subr.mxu0 0.0
    %90 = vmatpush1.msra.mxu0 %v40
    %91 = vmatprep.subr.mxu0 0.0
    %92 = vmatpush1.msra.mxu0 %v41
    %93 = vmatprep.subr.mxu0 0.0
    %94 = vmatpush1.msra.mxu0 %v42
    %95 = vmatprep.subr.mxu0 0.0
    %96 = vmatpush1.msra.mxu0 %v43
    %97 = vmatprep.subr.mxu0 0.0
    %98 = vmatpush1.msra.mxu0 %v44
    %99 = vmatprep.subr.mxu0 0.0
    %100 = vmatpush1.msra.mxu0 %v45
    %101 = vmatprep.subr.mxu0 0.0
    %102 = vmatpush1.msra.mxu0 %v46
    %103 = vmatprep.subr.mxu0 0.0
    %104 = vmatpush1.msra.mxu0 %v47
    %105 = vmatprep.subr.mxu0 0.0
    %106 = vmatpush1.msra.mxu0 %v48
    %107 = vmatprep.subr.mxu0 0.0
    %108 = vmatpush1.msra.mxu0 0.0
    %109 = vmatprep.subr.mxu0 0.0
    %110 = vmatpush1.msra.mxu0 0.0
    %111 = vmatprep.subr.mxu0 0.0
    %112 = vmatpush1.msra.mxu0 0.0
    %113 = vmatprep.subr.mxu0 0.0
    %114 = vmatpush1.msra.mxu0 0.0
    %115 = vmatprep.subr.mxu0 0.0
    %116 = vmatpush1.msra.mxu0 0.0
    %117 = vmatprep.subr.mxu0 0.0
    %118 = vmatpush1.msra.mxu0 0.0
    %119 = vmatprep.subr.mxu0 0.0
    %120 = vmatpush1.msra.mxu0 0.0
    %121 = vmatprep.subr.mxu0 0.0
    %122 = vmatpush1.msra.mxu0 0.0
    %123 = vmatprep.subr.mxu0 0.0
    %124 = vmatpush1.msra.mxu0 0.0
    %125 = vmatprep.subr.mxu0 0.0
    %126 = vmatpush1.msra.mxu0 0.0
    %127 = vmatprep.subr.mxu0 0.0
    %128 = vmatpush1.msra.mxu0 0.0
    %129 = vmatprep.subr.mxu0 0.0
    %130 = vmatpush1.msra.mxu0 0.0
    %131 = vmatprep.subr.mxu0 0.0
    %132 = vmatpush1.msra.mxu0 0.0
    %133 = vmatprep.subr.mxu0 0.0
    %134 = vmatpush1.msra.mxu0 0.0
    %135 = vmatprep.subr.mxu0 0.0
    %136 = vmatpush1.msra.mxu0 0.0
    %137 = vmatprep.subr.mxu0 0.0
    %138 = vmatpush1.msra.mxu0 0.0
    %139 = vmatprep.mubr.f32.mxu0 0.0
    %140 = vmatmul.mubr.f32.gmra.mrb[0].mxu0 %v70
    %v141 = vpop.f32.mrb[0].mxu0
    %v142 = vadd.f32 %v74, %v141
    %v143 = vpop.f32.mrb[0].mxu0
    %144 = vdwg.mxu0
    %vm145 = vcmask 261120
    %v147 = vsel %vm145, 0.0, 0
    %149 = vmatprep.subr.mxu0 0.0
    %150 = vmatpush1.msra.mxu0 %v49
    %151 = vmatprep.subr.mxu0 0.0
    %152 = vmatpush1.msra.mxu0 %v50
    %153 = vmatprep.subr.mxu0 0.0
    %154 = vmatpush1.msra.mxu0 %v51
    %155 = vmatprep.subr.mxu0 0.0
    %156 = vmatpush1.msra.mxu0 %v52
    %157 = vmatprep.subr.mxu0 0.0
    %158 = vmatpush1.msra.mxu0 0.0
    %159 = vmatprep.subr.mxu0 0.0
    %160 = vmatpush1.msra.mxu0 0.0
    %161 = vmatprep.subr.mxu0 0.0
    %162 = vmatpush1.msra.mxu0 0.0
    %163 = vmatprep.subr.mxu0 0.0
    %164 = vmatpush1.msra.mxu0 0.0
    %165 = vmatprep.subr.mxu0 0.0
    %166 = vmatpush1.msra.mxu0 0.0
    %167 = vmatprep.subr.mxu0 0.0
    %168 = vmatpush1.msra.mxu0 0.0
    %169 = vmatprep.subr.mxu0 0.0
    %170 = vmatpush1.msra.mxu0 0.0
    %171 = vmatprep.subr.mxu0 0.0
    %172 = vmatpush1.msra.mxu0 0.0
    %173 = vmatprep.subr.mxu0 0.0
    %174 = vmatpush1.msra.mxu0 0.0
    %175 = vmatprep.subr.mxu0 0.0
    %176 = vmatpush1.msra.mxu0 0.0
    %177 = vmatprep.subr.mxu0 0.0
    %178 = vmatpush1.msra.mxu0 0.0
    %179 = vmatprep.subr.mxu0 0.0
    %180 = vmatpush1.msra.mxu0 0.0
    %181 = vmatprep.subr.mxu0 0.0
    %182 = vmatpush1.msra.mxu0 0.0
    %183 = vmatprep.subr.mxu0 0.0
    %184 = vmatpush1.msra.mxu0 0.0
    %185 = vmatprep.subr.mxu0 0.0
    %186 = vmatpush1.msra.mxu0 0.0
    %187 = vmatprep.subr.mxu0 0.0
    %188 = vmatpush1.msra.mxu0 0.0
    %189 = vmatprep.subr.mxu0 0.0
    %190 = vmatpush1.msra.mxu0 0.0
    %191 = vmatprep.subr.mxu0 0.0
    %192 = vmatpush1.msra.mxu0 0.0
    %193 = vmatprep.subr.mxu0 0.0
    %194 = vmatpush1.msra.mxu0 0.0
    %195 = vmatprep.subr.mxu0 0.0
    %196 = vmatpush1.msra.mxu0 0.0
    %197 = vmatprep.subr.mxu0 0.0
    %198 = vmatpush1.msra.mxu0 0.0
    %199 = vmatprep.subr.mxu0 0.0
    %200 = vmatpush1.msra.mxu0 0.0
    %201 = vmatprep.subr.mxu0 0.0
    %202 = vmatpush1.msra.mxu0 0.0
    %203 = vmatprep.subr.mxu0 0.0
    %204 = vmatpush1.msra.mxu0 0.0
    %205 = vmatprep.subr.mxu0 0.0
    %206 = vmatpush1.msra.mxu0 0.0
    %207 = vmatprep.subr.mxu0 0.0
    %208 = vmatpush1.msra.mxu0 0.0
    %209 = vmatprep.subr.mxu0 0.0
    %210 = vmatpush1.msra.mxu0 0.0
    %211 = vmatprep.subr.mxu0 0.0
    %212 = vmatpush1.msra.mxu0 0.0
    %213 = vmatprep.mubr.f32.mxu0 0.0
    %214 = vmatmul.mubr.f32.gmra.mrb[0].mxu0 %v147
    %v215 = vpop.f32.mrb[0].mxu0
    %v216 = vadd.f32 0.0, %v215
    %v217 = vpop.f32.mrb[0].mxu0
    %218 = vdwg.mxu0
    %v219 = vadd.f32 %v142, %v216
    %v220 = vxor.u32 %v219, 2147483648
    %v221 = vmul.f32 %v220, 1.442695
    %v222 = vpow.pop %v221
    %v223 = vadd.f32 %v222, 1.0
    %v224 = vrcp.pop %v223
    %v225 = vmul.f32 1.0, %v224
    %227 = vrot.lane.b32.xlu0 %v66, 64
    %v228 = vpop.permute.xlu0 %227
    %v230 = vadd.f32 %v216, %v228
    %232 = vrot.lane.b32.xlu0 %v230, 64
    %v233 = vpop.permute.xlu0 %232
    %v235 = vmul.f32 %v225, %v233
    %237 = vrot.lane.b32.xlu0 %v235, 64
    %v238 = vpop.permute.xlu0 %237
    %v240 = vadd.f32 %v142, %v238
    %v241 = vtanh.pop %v240
    %v242 = vsub.f32 1.0, %v225
    %244 = vrot.lane.b32.xlu0 %v241, 96
    %v245 = vpop.permute.xlu0 %244
    %v247 = vmul.f32 %v242, %v245
    %v248 = vmul.f32 %v225, 0.0
    %v249 = vadd.f32 %v247, %v248
    %251 = vrot.lane.b32.xlu0 %v249, 96
    %v252 = vpop.permute.xlu0 %251
    %v253 = vsel %vm145, %v252, 0
    %255 = vmatprep.subr.mxu0 0.0
    %256 = vmatpush1.msra.mxu0 %v49
    %257 = vmatprep.subr.mxu0 0.0
    %258 = vmatpush1.msra.mxu0 %v50
    %259 = vmatprep.subr.mxu0 0.0
    %260 = vmatpush1.msra.mxu0 %v51
    %261 = vmatprep.subr.mxu0 0.0
    %262 = vmatpush1.msra.mxu0 %v52
    %263 = vmatprep.subr.mxu0 0.0
    %264 = vmatpush1.msra.mxu0 0.0
    %265 = vmatprep.subr.mxu0 0.0
    %266 = vmatpush1.msra.mxu0 0.0
    %267 = vmatprep.subr.mxu0 0.0
    %268 = vmatpush1.msra.mxu0 0.0
    %269 = vmatprep.subr.mxu0 0.0
    %270 = vmatpush1.msra.mxu0 0.0
    %271 = vmatprep.subr.mxu0 0.0
    %272 = vmatpush1.msra.mxu0 0.0
    %273 = vmatprep.subr.mxu0 0.0
    %274 = vmatpush1.msra.mxu0 0.0
    %275 = vmatprep.subr.mxu0 0.0
    %276 = vmatpush1.msra.mxu0 0.0
    %277 = vmatprep.subr.mxu0 0.0
    %278 = vmatpush1.msra.mxu0 0.0
    %279 = vmatprep.subr.mxu0 0.0
    %280 = vmatpush1.msra.mxu0 0.0
    %281 = vmatprep.subr.mxu0 0.0
    %282 = vmatpush1.msra.mxu0 0.0
    %283 = vmatprep.subr.mxu0 0.0
    %284 = vmatpush1.msra.mxu0 0.0
    %285 = vmatprep.subr.mxu0 0.0
    %286 = vmatpush1.msra.mxu0 0.0
    %287 = vmatprep.subr.mxu0 0.0
    %288 = vmatpush1.msra.mxu0 0.0
    %289 = vmatprep.subr.mxu0 0.0
    %290 = vmatpush1.msra.mxu0 0.0
    %291 = vmatprep.subr.mxu0 0.0
    %292 = vmatpush1.msra.mxu0 0.0
    %293 = vmatprep.subr.mxu0 0.0
    %294 = vmatpush1.msra.mxu0 0.0
    %295 = vmatprep.subr.mxu0 0.0
    %296 = vmatpush1.msra.mxu0 0.0
    %297 = vmatprep.subr.mxu0 0.0
    %298 = vmatpush1.msra.mxu0 0.0
    %299 = vmatprep.subr.mxu0 0.0
    %300 = vmatpush1.msra.mxu0 0.0
    %301 = vmatprep.subr.mxu0 0.0
    %302 = vmatpush1.msra.mxu0 0.0
    %303 = vmatprep.subr.mxu0 0.0
    %304 = vmatpush1.msra.mxu0 0.0
    %305 = vmatprep.subr.mxu0 0.0
    %306 = vmatpush1.msra.mxu0 0.0
    %307 = vmatprep.subr.mxu0 0.0
    %308 = vmatpush1.msra.mxu0 0.0
    %309 = vmatprep.subr.mxu0 0.0
    %310 = vmatpush1.msra.mxu0 0.0
    %311 = vmatprep.subr.mxu0 0.0
    %312 = vmatpush1.msra.mxu0 0.0
    %313 = vmatprep.subr.mxu0 0.0
    %314 = vmatpush1.msra.mxu0 0.0
    %315 = vmatprep.subr.mxu0 0.0
    %316 = vmatpush1.msra.mxu0 0.0
    %317 = vmatprep.subr.mxu0 0.0
    %318 = vmatpush1.msra.mxu0 0.0
    %319 = vmatprep.mubr.f32.mxu0 0.0
    %320 = vmatmul.mubr.f32.gmra.mrb[0].mxu0 %v253
    %v321 = vpop.f32.mrb[0].mxu0
    %v322 = vadd.f32 0.0, %v321
    %v323 = vpop.f32.mrb[0].mxu0
    %324 = vdwg.mxu0
    %v326 = vrot.slane %v322, 7
    %v328 = vadd.f32 %v142, %v326
    %v329 = vxor.u32 %v328, 2147483648
    %v330 = vmul.f32 %v329, 1.442695
    %v331 = vpow.pop %v330
    %v332 = vadd.f32 %v331, 1.0
    %v333 = vrcp.pop %v332
    %v334 = vmul.f32 1.0, %v333
    %v335 = vadd.f32 %v322, %v228
    %v337 = vrot.slane %v335, 7
    %338 = vrot.lane.b32.xlu0 %v337, 64
    %v339 = vpop.permute.xlu0 %338
    %v341 = vmul.f32 %v334, %v339
    %343 = vrot.lane.b32.xlu0 %v341, 64
    %v344 = vpop.permute.xlu0 %343
    %v346 = vadd.f32 %v142, %v344
    %v347 = vtanh.pop %v346
    %v348 = vsub.f32 1.0, %v334
    %350 = vrot.lane.b32.xlu0 %v347, 96
    %v351 = vpop.permute.xlu0 %350
    %v353 = vmul.f32 %v348, %v351
    %v354 = vrot.slane %v249, 7
    %v356 = vmul.f32 %v334, %v354
    %v357 = vadd.f32 %v353, %v356
    %v359 = vrot.slane %v357, 1
    %360 = vrot.lane.b32.xlu0 %v359, 96
    %v361 = vpop.permute.xlu0 %360
    %v362 = vsel %vm145, %v361, 0
    %364 = vmatprep.subr.mxu0 0.0
    %365 = vmatpush1.msra.mxu0 %v49
    %366 = vmatprep.subr.mxu0 0.0
    %367 = vmatpush1.msra.mxu0 %v50
    %368 = vmatprep.subr.mxu0 0.0
    %369 = vmatpush1.msra.mxu0 %v51
    %370 = vmatprep.subr.mxu0 0.0
    %371 = vmatpush1.msra.mxu0 %v52
    %372 = vmatprep.subr.mxu0 0.0
    %373 = vmatpush1.msra.mxu0 0.0
    %374 = vmatprep.subr.mxu0 0.0
    %375 = vmatpush1.msra.mxu0 0.0
    %376 = vmatprep.subr.mxu0 0.0
    %377 = vmatpush1.msra.mxu0 0.0
    %378 = vmatprep.subr.mxu0 0.0
    %379 = vmatpush1.msra.mxu0 0.0
    %380 = vmatprep.subr.mxu0 0.0
    %381 = vmatpush1.msra.mxu0 0.0
    %382 = vmatprep.subr.mxu0 0.0
    %383 = vmatpush1.msra.mxu0 0.0
    %384 = vmatprep.subr.mxu0 0.0
    %385 = vmatpush1.msra.mxu0 0.0
    %386 = vmatprep.subr.mxu0 0.0
    %387 = vmatpush1.msra.mxu0 0.0
    %388 = vmatprep.subr.mxu0 0.0
    %389 = vmatpush1.msra.mxu0 0.0
    %390 = vmatprep.subr.mxu0 0.0
    %391 = vmatpush1.msra.mxu0 0.0
    %392 = vmatprep.subr.mxu0 0.0
    %393 = vmatpush1.msra.mxu0 0.0
    %394 = vmatprep.subr.mxu0 0.0
    %395 = vmatpush1.msra.mxu0 0.0
    %396 = vmatprep.subr.mxu0 0.0
    %397 = vmatpush1.msra.mxu0 0.0
    %398 = vmatprep.subr.mxu0 0.0
    %399 = vmatpush1.msra.mxu0 0.0
    %400 = vmatprep.subr.mxu0 0.0
    %401 = vmatpush1.msra.mxu0 0.0
    %402 = vmatprep.subr.mxu0 0.0
    %403 = vmatpush1.msra.mxu0 0.0
    %404 = vmatprep.subr.mxu0 0.0
    %405 = vmatpush1.msra.mxu0 0.0
    %406 = vmatprep.subr.mxu0 0.0
    %407 = vmatpush1.msra.mxu0 0.0
    %408 = vmatprep.subr.mxu0 0.0
    %409 = vmatpush1.msra.mxu0 0.0
    %410 = vmatprep.subr.mxu0 0.0
    %411 = vmatpush1.msra.mxu0 0.0
    %412 = vmatprep.subr.mxu0 0.0
    %413 = vmatpush1.msra.mxu0 0.0
    %414 = vmatprep.subr.mxu0 0.0
    %415 = vmatpush1.msra.mxu0 0.0
    %416 = vmatprep.subr.mxu0 0.0
    %417 = vmatpush1.msra.mxu0 0.0
    %418 = vmatprep.subr.mxu0 0.0
    %419 = vmatpush1.msra.mxu0 0.0
    %420 = vmatprep.subr.mxu0 0.0
    %421 = vmatpush1.msra.mxu0 0.0
    %422 = vmatprep.subr.mxu0 0.0
    %423 = vmatpush1.msra.mxu0 0.0
    %424 = vmatprep.subr.mxu0 0.0
    %425 = vmatpush1.msra.mxu0 0.0
    %426 = vmatprep.subr.mxu0 0.0
    %427 = vmatpush1.msra.mxu0 0.0
    %428 = vmatprep.mubr.f32.mxu0 0.0
    %429 = vmatmul.mubr.f32.gmra.mrb[0].mxu0 %v362
    %v430 = vpop.f32.mrb[0].mxu0
    %v431 = vadd.f32 0.0, %v430
    %v432 = vpop.f32.mrb[0].mxu0
    %433 = vdwg.mxu0
    %v435 = vrot.slane %v431, 6
    %v437 = vadd.f32 %v142, %v435
    %v438 = vxor.u32 %v437, 2147483648
    %v439 = vmul.f32 %v438, 1.442695
    %v440 = vpow.pop %v439
    %v441 = vadd.f32 %v440, 1.0
    %v442 = vrcp.pop %v441
    %v443 = vmul.f32 1.0, %v442
    %v444 = vadd.f32 %v431, %v228
    %v446 = vrot.slane %v444, 6
    %447 = vrot.lane.b32.xlu0 %v446, 64
    %v448 = vpop.permute.xlu0 %447
    %v450 = vmul.f32 %v443, %v448
    %452 = vrot.lane.b32.xlu0 %v450, 64
    %v453 = vpop.permute.xlu0 %452
    %v455 = vadd.f32 %v142, %v453
    %v456 = vtanh.pop %v455
    %v457 = vsub.f32 1.0, %v443
    %459 = vrot.lane.b32.xlu0 %v456, 96
    %v460 = vpop.permute.xlu0 %459
    %v462 = vmul.f32 %v457, %v460
    %v463 = vrot.slane %v357, 7
    %v465 = vmul.f32 %v443, %v463
    %v466 = vadd.f32 %v462, %v465
    %v468 = vrot.slane %v466, 2
    %469 = vrot.lane.b32.xlu0 %v468, 96
    %v470 = vpop.permute.xlu0 %469
    %v471 = vsel %vm145, %v470, 0
    %473 = vmatprep.subr.mxu0 0.0
    %474 = vmatpush1.msra.mxu0 %v49
    %475 = vmatprep.subr.mxu0 0.0
    %476 = vmatpush1.msra.mxu0 %v50
    %477 = vmatprep.subr.mxu0 0.0
    %478 = vmatpush1.msra.mxu0 %v51
    %479 = vmatprep.subr.mxu0 0.0
    %480 = vmatpush1.msra.mxu0 %v52
    %481 = vmatprep.subr.mxu0 0.0
    %482 = vmatpush1.msra.mxu0 0.0
    %483 = vmatprep.subr.mxu0 0.0
    %484 = vmatpush1.msra.mxu0 0.0
    %485 = vmatprep.subr.mxu0 0.0
    %486 = vmatpush1.msra.mxu0 0.0
    %487 = vmatprep.subr.mxu0 0.0
    %488 = vmatpush1.msra.mxu0 0.0
    %489 = vmatprep.subr.mxu0 0.0
    %490 = vmatpush1.msra.mxu0 0.0
    %491 = vmatprep.subr.mxu0 0.0
    %492 = vmatpush1.msra.mxu0 0.0
    %493 = vmatprep.subr.mxu0 0.0
    %494 = vmatpush1.msra.mxu0 0.0
    %495 = vmatprep.subr.mxu0 0.0
    %496 = vmatpush1.msra.mxu0 0.0
    %497 = vmatprep.subr.mxu0 0.0
    %498 = vmatpush1.msra.mxu0 0.0
    %499 = vmatprep.subr.mxu0 0.0
    %500 = vmatpush1.msra.mxu0 0.0
    %501 = vmatprep.subr.mxu0 0.0
    %502 = vmatpush1.msra.mxu0 0.0
    %503 = vmatprep.subr.mxu0 0.0
    %504 = vmatpush1.msra.mxu0 0.0
    %505 = vmatprep.subr.mxu0 0.0
    %506 = vmatpush1.msra.mxu0 0.0
    %507 = vmatprep.subr.mxu0 0.0
    %508 = vmatpush1.msra.mxu0 0.0
    %509 = vmatprep.subr.mxu0 0.0
    %510 = vmatpush1.msra.mxu0 0.0
    %511 = vmatprep.subr.mxu0 0.0
    %512 = vmatpush1.msra.mxu0 0.0
    %513 = vmatprep.subr.mxu0 0.0
    %514 = vmatpush1.msra.mxu0 0.0
    %515 = vmatprep.subr.mxu0 0.0
    %516 = vmatpush1.msra.mxu0 0.0
    %517 = vmatprep.subr.mxu0 0.0
    %518 = vmatpush1.msra.mxu0 0.0
    %519 = vmatprep.subr.mxu0 0.0
    %520 = vmatpush1.msra.mxu0 0.0
    %521 = vmatprep.subr.mxu0 0.0
    %522 = vmatpush1.msra.mxu0 0.0
    %523 = vmatprep.subr.mxu0 0.0
    %524 = vmatpush1.msra.mxu0 0.0
    %525 = vmatprep.subr.mxu0 0.0
    %526 = vmatpush1.msra.mxu0 0.0
    %527 = vmatprep.subr.mxu0 0.0
    %528 = vmatpush1.msra.mxu0 0.0
    %529 = vmatprep.subr.mxu0 0.0
    %530 = vmatpush1.msra.mxu0 0.0
    %531 = vmatprep.subr.mxu0 0.0
    %532 = vmatpush1.msra.mxu0 0.0
    %533 = vmatprep.subr.mxu0 0.0
    %534 = vmatpush1.msra.mxu0 0.0
    %535 = vmatprep.subr.mxu0 0.0
    %536 = vmatpush1.msra.mxu0 0.0
    %537 = vmatprep.mubr.f32.mxu0 0.0
    %538 = vmatmul.mubr.f32.gmra.mrb[0].mxu0 %v471
    %v539 = vpop.f32.mrb[0].mxu0
    %v540 = vadd.f32 0.0, %v539
    %v541 = vpop.f32.mrb[0].mxu0
    %542 = vdwg.mxu0
    %v544 = vrot.slane %v540, 5
    %v546 = vadd.f32 %v142, %v544
    %v547 = vxor.u32 %v546, 2147483648
    %v548 = vmul.f32 %v547, 1.442695
    %v549 = vpow.pop %v548
    %v550 = vadd.f32 %v549, 1.0
    %v551 = vrcp.pop %v550
    %v552 = vmul.f32 1.0, %v551
    %v553 = vadd.f32 %v540, %v228
    %v555 = vrot.slane %v553, 5
    %556 = vrot.lane.b32.xlu0 %v555, 64
    %v557 = vpop.permute.xlu0 %556
    %v559 = vmul.f32 %v552, %v557
    %561 = vrot.lane.b32.xlu0 %v559, 64
    %v562 = vpop.permute.xlu0 %561
    %v564 = vadd.f32 %v142, %v562
    %v565 = vtanh.pop %v564
    %v566 = vsub.f32 1.0, %v552
    %568 = vrot.lane.b32.xlu0 %v565, 96
    %v569 = vpop.permute.xlu0 %568
    %v571 = vmul.f32 %v566, %v569
    %v572 = vrot.slane %v466, 7
    %v574 = vmul.f32 %v552, %v572
    %v575 = vadd.f32 %v571, %v574
    %v577 = vrot.slane %v575, 3
    %578 = vrot.lane.b32.xlu0 %v577, 96
    %v579 = vpop.permute.xlu0 %578
    %v580 = vsel %vm145, %v579, 0
    %582 = vmatprep.subr.mxu0 0.0
    %583 = vmatpush1.msra.mxu0 %v49
    %584 = vmatprep.subr.mxu0 0.0
    %585 = vmatpush1.msra.mxu0 %v50
    %586 = vmatprep.subr.mxu0 0.0
    %587 = vmatpush1.msra.mxu0 %v51
    %588 = vmatprep.subr.mxu0 0.0
    %589 = vmatpush1.msra.mxu0 %v52
    %590 = vmatprep.subr.mxu0 0.0
    %591 = vmatpush1.msra.mxu0 0.0
    %592 = vmatprep.subr.mxu0 0.0
    %593 = vmatpush1.msra.mxu0 0.0
    %594 = vmatprep.subr.mxu0 0.0
    %595 = vmatpush1.msra.mxu0 0.0
    %596 = vmatprep.subr.mxu0 0.0
    %597 = vmatpush1.msra.mxu0 0.0
    %598 = vmatprep.subr.mxu0 0.0
    %599 = vmatpush1.msra.mxu0 0.0
    %600 = vmatprep.subr.mxu0 0.0
    %601 = vmatpush1.msra.mxu0 0.0
    %602 = vmatprep.subr.mxu0 0.0
    %603 = vmatpush1.msra.mxu0 0.0
    %604 = vmatprep.subr.mxu0 0.0
    %605 = vmatpush1.msra.mxu0 0.0
    %606 = vmatprep.subr.mxu0 0.0
    %607 = vmatpush1.msra.mxu0 0.0
    %608 = vmatprep.subr.mxu0 0.0
    %609 = vmatpush1.msra.mxu0 0.0
    %610 = vmatprep.subr.mxu0 0.0
    %611 = vmatpush1.msra.mxu0 0.0
    %612 = vmatprep.subr.mxu0 0.0
    %613 = vmatpush1.msra.mxu0 0.0
    %614 = vmatprep.subr.mxu0 0.0
    %615 = vmatpush1.msra.mxu0 0.0
    %616 = vmatprep.subr.mxu0 0.0
    %617 = vmatpush1.msra.mxu0 0.0
    %618 = vmatprep.subr.mxu0 0.0
    %619 = vmatpush1.msra.mxu0 0.0
    %620 = vmatprep.subr.mxu0 0.0
    %621 = vmatpush1.msra.mxu0 0.0
    %622 = vmatprep.subr.mxu0 0.0
    %623 = vmatpush1.msra.mxu0 0.0
    %624 = vmatprep.subr.mxu0 0.0
    %625 = vmatpush1.msra.mxu0 0.0
    %626 = vmatprep.subr.mxu0 0.0
    %627 = vmatpush1.msra.mxu0 0.0
    %628 = vmatprep.subr.mxu0 0.0
    %629 = vmatpush1.msra.mxu0 0.0
    %630 = vmatprep.subr.mxu0 0.0
    %631 = vmatpush1.msra.mxu0 0.0
    %632 = vmatprep.subr.mxu0 0.0
    %633 = vmatpush1.msra.mxu0 0.0
    %634 = vmatprep.subr.mxu0 0.0
    %635 = vmatpush1.msra.mxu0 0.0
    %636 = vmatprep.subr.mxu0 0.0
    %637 = vmatpush1.msra.mxu0 0.0
    %638 = vmatprep.subr.mxu0 0.0
    %639 = vmatpush1.msra.mxu0 0.0
    %640 = vmatprep.subr.mxu0 0.0
    %641 = vmatpush1.msra.mxu0 0.0
    %642 = vmatprep.subr.mxu0 0.0
    %643 = vmatpush1.msra.mxu0 0.0
    %644 = vmatprep.subr.mxu0 0.0
    %645 = vmatpush1.msra.mxu0 0.0
    %646 = vmatprep.mubr.f32.mxu0 0.0
    %647 = vmatmul.mubr.f32.gmra.mrb[0].mxu0 %v580
    %v648 = vpop.f32.mrb[0].mxu0
    %v649 = vadd.f32 0.0, %v648
    %v650 = vpop.f32.mrb[0].mxu0
    %651 = vdwg.mxu0
    %v653 = vrot.slane %v649, 4
    %v655 = vadd.f32 %v142, %v653
    %v656 = vxor.u32 %v655, 2147483648
    %v657 = vmul.f32 %v656, 1.442695
    %v658 = vpow.pop %v657
    %v659 = vadd.f32 %v658, 1.0
    %v660 = vrcp.pop %v659
    %v661 = vmul.f32 1.0, %v660
    %v662 = vadd.f32 %v649, %v228
    %v664 = vrot.slane %v662, 4
    %665 = vrot.lane.b32.xlu0 %v664, 64
    %v666 = vpop.permute.xlu0 %665
    %v668 = vmul.f32 %v661, %v666
    %670 = vrot.lane.b32.xlu0 %v668, 64
    %v671 = vpop.permute.xlu0 %670
    %v673 = vadd.f32 %v142, %v671
    %v674 = vtanh.pop %v673
    %v675 = vsub.f32 1.0, %v661
    %677 = vrot.lane.b32.xlu0 %v674, 96
    %v678 = vpop.permute.xlu0 %677
    %v680 = vmul.f32 %v675, %v678
    %v681 = vrot.slane %v575, 7
    %v683 = vmul.f32 %v661, %v681
    %v684 = vadd.f32 %v680, %v683
    %v686 = vrot.slane %v684, 4
    %687 = vrot.lane.b32.xlu0 %v686, 96
    %v688 = vpop.permute.xlu0 %687
    %v689 = vsel %vm145, %v688, 0
    %691 = vmatprep.subr.mxu0 0.0
    %692 = vmatpush1.msra.mxu0 %v49
    %693 = vmatprep.subr.mxu0 0.0
    %694 = vmatpush1.msra.mxu0 %v50
    %695 = vmatprep.subr.mxu0 0.0
    %696 = vmatpush1.msra.mxu0 %v51
    %697 = vmatprep.subr.mxu0 0.0
    %698 = vmatpush1.msra.mxu0 %v52
    %699 = vmatprep.subr.mxu0 0.0
    %700 = vmatpush1.msra.mxu0 0.0
    %701 = vmatprep.subr.mxu0 0.0
    %702 = vmatpush1.msra.mxu0 0.0
    %703 = vmatprep.subr.mxu0 0.0
    %704 = vmatpush1.msra.mxu0 0.0
    %705 = vmatprep.subr.mxu0 0.0
    %706 = vmatpush1.msra.mxu0 0.0
    %707 = vmatprep.subr.mxu0 0.0
    %708 = vmatpush1.msra.mxu0 0.0
    %709 = vmatprep.subr.mxu0 0.0
    %710 = vmatpush1.msra.mxu0 0.0
    %711 = vmatprep.subr.mxu0 0.0
    %712 = vmatpush1.msra.mxu0 0.0
    %713 = vmatprep.subr.mxu0 0.0
    %714 = vmatpush1.msra.mxu0 0.0
    %715 = vmatprep.subr.mxu0 0.0
    %716 = vmatpush1.msra.mxu0 0.0
    %717 = vmatprep.subr.mxu0 0.0
    %718 = vmatpush1.msra.mxu0 0.0
    %719 = vmatprep.subr.mxu0 0.0
    %720 = vmatpush1.msra.mxu0 0.0
    %721 = vmatprep.subr.mxu0 0.0
    %722 = vmatpush1.msra.mxu0 0.0
    %723 = vmatprep.subr.mxu0 0.0
    %724 = vmatpush1.msra.mxu0 0.0
    %725 = vmatprep.subr.mxu0 0.0
    %726 = vmatpush1.msra.mxu0 0.0
    %727 = vmatprep.subr.mxu0 0.0
    %728 = vmatpush1.msra.mxu0 0.0
    %729 = vmatprep.subr.mxu0 0.0
    %730 = vmatpush1.msra.mxu0 0.0
    %731 = vmatprep.subr.mxu0 0.0
    %732 = vmatpush1.msra.mxu0 0.0
    %733 = vmatprep.subr.mxu0 0.0
    %734 = vmatpush1.msra.mxu0 0.0
    %735 = vmatprep.subr.mxu0 0.0
    %736 = vmatpush1.msra.mxu0 0.0
    %737 = vmatprep.subr.mxu0 0.0
    %738 = vmatpush1.msra.mxu0 0.0
    %739 = vmatprep.subr.mxu0 0.0
    %740 = vmatpush1.msra.mxu0 0.0
    %741 = vmatprep.subr.mxu0 0.0
    %742 = vmatpush1.msra.mxu0 0.0
    %743 = vmatprep.subr.mxu0 0.0
    %744 = vmatpush1.msra.mxu0 0.0
    %745 = vmatprep.subr.mxu0 0.0
    %746 = vmatpush1.msra.mxu0 0.0
    %747 = vmatprep.subr.mxu0 0.0
    %748 = vmatpush1.msra.mxu0 0.0
    %749 = vmatprep.subr.mxu0 0.0
    %750 = vmatpush1.msra.mxu0 0.0
    %751 = vmatprep.subr.mxu0 0.0
    %752 = vmatpush1.msra.mxu0 0.0
    %753 = vmatprep.subr.mxu0 0.0
    %754 = vmatpush1.msra.mxu0 0.0
    %755 = vmatprep.mubr.f32.mxu0 0.0
    %756 = vmatmul.mubr.f32.gmra.mrb[0].mxu0 %v689
    %v757 = vpop.f32.mrb[0].mxu0
    %v758 = vadd.f32 0.0, %v757
    %v759 = vpop.f32.mrb[0].mxu0
    %760 = vdwg.mxu0
    %v762 = vrot.slane %v758, 3
    %v764 = vadd.f32 %v142, %v762
    %v765 = vxor.u32 %v764, 2147483648
    %v766 = vmul.f32 %v765, 1.442695
    %v767 = vpow.pop %v766
    %v768 = vadd.f32 %v767, 1.0
    %v769 = vrcp.pop %v768
    %v770 = vmul.f32 1.0, %v769
    %v771 = vadd.f32 %v758, %v228
    %v773 = vrot.slane %v771, 3
    %774 = vrot.lane.b32.xlu0 %v773, 64
    %v775 = vpop.permute.xlu0 %774
    %v777 = vmul.f32 %v770, %v775
    %779 = vrot.lane.b32.xlu0 %v777, 64
    %v780 = vpop.permute.xlu0 %779
    %v782 = vadd.f32 %v142, %v780
    %v783 = vtanh.pop %v782
    %v784 = vsub.f32 1.0, %v770
    %786 = vrot.lane.b32.xlu0 %v783, 96
    %v787 = vpop.permute.xlu0 %786
    %v789 = vmul.f32 %v784, %v787
    %v790 = vrot.slane %v684, 7
    %v792 = vmul.f32 %v770, %v790
    %v793 = vadd.f32 %v789, %v792
    %v795 = vrot.slane %v793, 5
    %796 = vrot.lane.b32.xlu0 %v795, 96
    %v797 = vpop.permute.xlu0 %796
    %v798 = vsel %vm145, %v797, 0
    %800 = vmatprep.subr.mxu0 0.0
    %801 = vmatpush1.msra.mxu0 %v49
    %802 = vmatprep.subr.mxu0 0.0
    %803 = vmatpush1.msra.mxu0 %v50
    %804 = vmatprep.subr.mxu0 0.0
    %805 = vmatpush1.msra.mxu0 %v51
    %806 = vmatprep.subr.mxu0 0.0
    %807 = vmatpush1.msra.mxu0 %v52
    %808 = vmatprep.subr.mxu0 0.0
    %809 = vmatpush1.msra.mxu0 0.0
    %810 = vmatprep.subr.mxu0 0.0
    %811 = vmatpush1.msra.mxu0 0.0
    %812 = vmatprep.subr.mxu0 0.0
    %813 = vmatpush1.msra.mxu0 0.0
    %814 = vmatprep.subr.mxu0 0.0
    %815 = vmatpush1.msra.mxu0 0.0
    %816 = vmatprep.subr.mxu0 0.0
    %817 = vmatpush1.msra.mxu0 0.0
    %818 = vmatprep.subr.mxu0 0.0
    %819 = vmatpush1.msra.mxu0 0.0
    %820 = vmatprep.subr.mxu0 0.0
    %821 = vmatpush1.msra.mxu0 0.0
    %822 = vmatprep.subr.mxu0 0.0
    %823 = vmatpush1.msra.mxu0 0.0
    %824 = vmatprep.subr.mxu0 0.0
    %825 = vmatpush1.msra.mxu0 0.0
    %826 = vmatprep.subr.mxu0 0.0
    %827 = vmatpush1.msra.mxu0 0.0
    %828 = vmatprep.subr.mxu0 0.0
    %829 = vmatpush1.msra.mxu0 0.0
    %830 = vmatprep.subr.mxu0 0.0
    %831 = vmatpush1.msra.mxu0 0.0
    %832 = vmatprep.subr.mxu0 0.0
    %833 = vmatpush1.msra.mxu0 0.0
    %834 = vmatprep.subr.mxu0 0.0
    %835 = vmatpush1.msra.mxu0 0.0
    %836 = vmatprep.subr.mxu0 0.0
    %837 = vmatpush1.msra.mxu0 0.0
    %838 = vmatprep.subr.mxu0 0.0
    %839 = vmatpush1.msra.mxu0 0.0
    %840 = vmatprep.subr.mxu0 0.0
    %841 = vmatpush1.msra.mxu0 0.0
    %842 = vmatprep.subr.mxu0 0.0
    %843 = vmatpush1.msra.mxu0 0.0
    %844 = vmatprep.subr.mxu0 0.0
    %845 = vmatpush1.msra.mxu0 0.0
    %846 = vmatprep.subr.mxu0 0.0
    %847 = vmatpush1.msra.mxu0 0.0
    %848 = vmatprep.subr.mxu0 0.0
    %849 = vmatpush1.msra.mxu0 0.0
    %850 = vmatprep.subr.mxu0 0.0
    %851 = vmatpush1.msra.mxu0 0.0
    %852 = vmatprep.subr.mxu0 0.0
    %853 = vmatpush1.msra.mxu0 0.0
    %854 = vmatprep.subr.mxu0 0.0
    %855 = vmatpush1.msra.mxu0 0.0
    %856 = vmatprep.subr.mxu0 0.0
    %857 = vmatpush1.msra.mxu0 0.0
    %858 = vmatprep.subr.mxu0 0.0
    %859 = vmatpush1.msra.mxu0 0.0
    %860 = vmatprep.subr.mxu0 0.0
    %861 = vmatpush1.msra.mxu0 0.0
    %862 = vmatprep.subr.mxu0 0.0
    %863 = vmatpush1.msra.mxu0 0.0
    %864 = vmatprep.mubr.f32.mxu0 0.0
    %865 = vmatmul.mubr.f32.gmra.mrb[0].mxu0 %v798
    %v866 = vpop.f32.mrb[0].mxu0
    %v867 = vadd.f32 0.0, %v866
    %v868 = vpop.f32.mrb[0].mxu0
    %869 = vdwg.mxu0
    %v871 = vrot.slane %v867, 2
    %v873 = vadd.f32 %v142, %v871
    %v874 = vxor.u32 %v873, 2147483648
    %v875 = vmul.f32 %v874, 1.442695
    %v876 = vpow.pop %v875
    %v877 = vadd.f32 %v876, 1.0
    %v878 = vrcp.pop %v877
    %v879 = vmul.f32 1.0, %v878
    %v880 = vadd.f32 %v867, %v228
    %v882 = vrot.slane %v880, 2
    %883 = vrot.lane.b32.xlu0 %v882, 64
    %v884 = vpop.permute.xlu0 %883
    %v886 = vmul.f32 %v879, %v884
    %888 = vrot.lane.b32.xlu0 %v886, 64
    %v889 = vpop.permute.xlu0 %888
    %v891 = vadd.f32 %v142, %v889
    %v892 = vtanh.pop %v891
    %v893 = vsub.f32 1.0, %v879
    %895 = vrot.lane.b32.xlu0 %v892, 96
    %v896 = vpop.permute.xlu0 %895
    %v898 = vmul.f32 %v893, %v896
    %v899 = vrot.slane %v793, 7
    %v901 = vmul.f32 %v879, %v899
    %v902 = vadd.f32 %v898, %v901
    %v904 = vrot.slane %v902, 6
    %905 = vrot.lane.b32.xlu0 %v904, 96
    %v906 = vpop.permute.xlu0 %905
    %v907 = vsel %vm145, %v906, 0
    %909 = vmatprep.subr.mxu0 0.0
    %910 = vmatpush1.msra.mxu0 %v49
    %911 = vmatprep.subr.mxu0 0.0
    %912 = vmatpush1.msra.mxu0 %v50
    %913 = vmatprep.subr.mxu0 0.0
    %914 = vmatpush1.msra.mxu0 %v51
    %915 = vmatprep.subr.mxu0 0.0
    %916 = vmatpush1.msra.mxu0 %v52
    %917 = vmatprep.subr.mxu0 0.0
    %918 = vmatpush1.msra.mxu0 0.0
    %919 = vmatprep.subr.mxu0 0.0
    %920 = vmatpush1.msra.mxu0 0.0
    %921 = vmatprep.subr.mxu0 0.0
    %922 = vmatpush1.msra.mxu0 0.0
    %923 = vmatprep.subr.mxu0 0.0
    %924 = vmatpush1.msra.mxu0 0.0
    %925 = vmatprep.subr.mxu0 0.0
    %926 = vmatpush1.msra.mxu0 0.0
    %927 = vmatprep.subr.mxu0 0.0
    %928 = vmatpush1.msra.mxu0 0.0
    %929 = vmatprep.subr.mxu0 0.0
    %930 = vmatpush1.msra.mxu0 0.0
    %931 = vmatprep.subr.mxu0 0.0
    %932 = vmatpush1.msra.mxu0 0.0
    %933 = vmatprep.subr.mxu0 0.0
    %934 = vmatpush1.msra.mxu0 0.0
    %935 = vmatprep.subr.mxu0 0.0
    %936 = vmatpush1.msra.mxu0 0.0
    %937 = vmatprep.subr.mxu0 0.0
    %938 = vmatpush1.msra.mxu0 0.0
    %939 = vmatprep.subr.mxu0 0.0
    %940 = vmatpush1.msra.mxu0 0.0
    %941 = vmatprep.subr.mxu0 0.0
    %942 = vmatpush1.msra.mxu0 0.0
    %943 = vmatprep.subr.mxu0 0.0
    %944 = vmatpush1.msra.mxu0 0.0
    %945 = vmatprep.subr.mxu0 0.0
    %946 = vmatpush1.msra.mxu0 0.0
    %947 = vmatprep.subr.mxu0 0.0
    %948 = vmatpush1.msra.mxu0 0.0
    %949 = vmatprep.subr.mxu0 0.0
    %950 = vmatpush1.msra.mxu0 0.0
    %951 = vmatprep.subr.mxu0 0.0
    %952 = vmatpush1.msra.mxu0 0.0
    %953 = vmatprep.subr.mxu0 0.0
    %954 = vmatpush1.msra.mxu0 0.0
    %955 = vmatprep.subr.mxu0 0.0
    %956 = vmatpush1.msra.mxu0 0.0
    %957 = vmatprep.subr.mxu0 0.0
    %958 = vmatpush1.msra.mxu0 0.0
    %959 = vmatprep.subr.mxu0 0.0
    %960 = vmatpush1.msra.mxu0 0.0
    %961 = vmatprep.subr.mxu0 0.0
    %962 = vmatpush1.msra.mxu0 0.0
    %963 = vmatprep.subr.mxu0 0.0
    %964 = vmatpush1.msra.mxu0 0.0
    %965 = vmatprep.subr.mxu0 0.0
    %966 = vmatpush1.msra.mxu0 0.0
    %967 = vmatprep.subr.mxu0 0.0
    %968 = vmatpush1.msra.mxu0 0.0
    %969 = vmatprep.subr.mxu0 0.0
    %970 = vmatpush1.msra.mxu0 0.0
    %971 = vmatprep.subr.mxu0 0.0
    %972 = vmatpush1.msra.mxu0 0.0
    %973 = vmatprep.mubr.f32.mxu0 0.0
    %974 = vmatmul.mubr.f32.gmra.mrb[0].mxu0 %v907
    %v975 = vpop.f32.mrb[0].mxu0
    %v976 = vadd.f32 0.0, %v975
    %v977 = vpop.f32.mrb[0].mxu0
    %978 = vdwg.mxu0
    %v980 = vrot.slane %v976, 1
    %v982 = vadd.f32 %v142, %v980
    %v983 = vxor.u32 %v982, 2147483648
    %v984 = vmul.f32 %v983, 1.442695
    %v985 = vpow.pop %v984
    %v986 = vadd.f32 %v985, 1.0
    %v987 = vrcp.pop %v986
    %v988 = vmul.f32 1.0, %v987
    %v989 = vadd.f32 %v976, %v228
    %v991 = vrot.slane %v989, 1
    %992 = vrot.lane.b32.xlu0 %v991, 64
    %v993 = vpop.permute.xlu0 %992
    %v995 = vmul.f32 %v988, %v993
    %997 = vrot.lane.b32.xlu0 %v995, 64
    %v998 = vpop.permute.xlu0 %997
    %v1000 = vadd.f32 %v142, %v998
    %v1001 = vtanh.pop %v1000
    %v1002 = vsub.f32 1.0, %v988
    %1004 = vrot.lane.b32.xlu0 %v1001, 96
    %v1005 = vpop.permute.xlu0 %1004
    %v1007 = vmul.f32 %v1002, %v1005
    %v1008 = vrot.slane %v902, 7
    %v1010 = vmul.f32 %v988, %v1008
    %v1011 = vadd.f32 %v1007, %v1010
    %vm1012 = vcmask 1040384
    %v1013 = vsel %vm1012, %v249, %v357
    %vm1014 = vcmask 1041408
    %v1015 = vsel %vm1014, %v1013, %v466
    %vm1016 = vcmask 1042432
    %v1017 = vsel %vm1016, %v1015, %v575
    %vm1018 = vcmask 1043456
    %v1019 = vsel %vm1018, %v1017, %v684
    %vm1020 = vcmask 1044480
    %v1021 = vsel %vm1020, %v1019, %v793
    %vm1022 = vcmask 1045504
    %v1023 = vsel %vm1022, %v1021, %v902
    %vm1024 = vcmask 1046528
    %v1025 = vsel %vm1024, %v1023, %v1011
    %1027 = vrot.lane.b32.xlu0 %v1025, 96
    %v1028 = vpop.permute.xlu0 %1027
    %1030 = vst.msk [vmem:[#allocation5] sm:$0xff] %vm145, %v1028
    %vm1031 = vcmask 523520
    %v1032 = vsel %vm1031, %v1025, 0.0
    %v1033 = vrot.slane %v1032, 4
    %v1034 = vadd.f32 %v1032, %v1033
    %v1035 = vrot.slane %v1034, 2
    %v1036 = vadd.f32 %v1034, %v1035
    %v1037 = vrot.slane %v1036, 1
    %v1038 = vadd.f32 %v1036, %v1037
    %v1039 = vrcp.pop 8.0
    %v1040 = vmul.f32 %v1038, %v1039
    %1042 = vrot.lane.b32.xlu0 %v1040, 96
    %v1043 = vpop.permute.xlu0 %1042
    %vm1045 = vcmask 253952
    %1046 = vst.msk [vmem:[#allocation6] sm:$0x1] %vm1045, %v1043
    %v1048 = vrot.slane %v1011, 7
    %1049 = vrot.lane.b32.xlu0 %v1048, 96
    %v1050 = vpop.permute.xlu0 %1049
    %v1051 = vsel %vm145, %v1050, 0
    %1053 = vmatprep.subr.mxu0 0.0
    %1054 = vmatpush1.msra.mxu0 %v53
    %1055 = vmatprep.subr.mxu0 0.0
    %1056 = vmatpush1.msra.mxu0 %v54
    %1057 = vmatprep.subr.mxu0 0.0
    %1058 = vmatpush1.msra.mxu0 %v55
    %1059 = vmatprep.subr.mxu0 0.0
    %1060 = vmatpush1.msra.mxu0 %v56
    %1061 = vmatprep.subr.mxu0 0.0
    %1062 = vmatpush1.msra.mxu0 0.0
    %1063 = vmatprep.subr.mxu0 0.0
    %1064 = vmatpush1.msra.mxu0 0.0
    %1065 = vmatprep.subr.mxu0 0.0
    %1066 = vmatpush1.msra.mxu0 0.0
    %1067 = vmatprep.subr.mxu0 0.0
    %1068 = vmatpush1.msra.mxu0 0.0
    %1069 = vmatprep.subr.mxu0 0.0
    %1070 = vmatpush1.msra.mxu0 0.0
    %1071 = vmatprep.subr.mxu0 0.0
    %1072 = vmatpush1.msra.mxu0 0.0
    %1073 = vmatprep.subr.mxu0 0.0
    %1074 = vmatpush1.msra.mxu0 0.0
    %1075 = vmatprep.subr.mxu0 0.0
    %1076 = vmatpush1.msra.mxu0 0.0
    %1077 = vmatprep.subr.mxu0 0.0
    %1078 = vmatpush1.msra.mxu0 0.0
    %1079 = vmatprep.subr.mxu0 0.0
    %1080 = vmatpush1.msra.mxu0 0.0
    %1081 = vmatprep.subr.mxu0 0.0
    %1082 = vmatpush1.msra.mxu0 0.0
    %1083 = vmatprep.subr.mxu0 0.0
    %1084 = vmatpush1.msra.mxu0 0.0
    %1085 = vmatprep.subr.mxu0 0.0
    %1086 = vmatpush1.msra.mxu0 0.0
    %1087 = vmatprep.subr.mxu0 0.0
    %1088 = vmatpush1.msra.mxu0 0.0
    %1089 = vmatprep.subr.mxu0 0.0
    %1090 = vmatpush1.msra.mxu0 0.0
    %1091 = vmatprep.subr.mxu0 0.0
    %1092 = vmatpush1.msra.mxu0 0.0
    %1093 = vmatprep.subr.mxu0 0.0
    %1094 = vmatpush1.msra.mxu0 0.0
    %1095 = vmatprep.subr.mxu0 0.0
    %1096 = vmatpush1.msra.mxu0 0.0
    %1097 = vmatprep.subr.mxu0 0.0
    %1098 = vmatpush1.msra.mxu0 0.0
    %1099 = vmatprep.subr.mxu0 0.0
    %1100 = vmatpush1.msra.mxu0 0.0
    %1101 = vmatprep.subr.mxu0 0.0
    %1102 = vmatpush1.msra.mxu0 0.0
    %1103 = vmatprep.subr.mxu0 0.0
    %1104 = vmatpush1.msra.mxu0 0.0
    %1105 = vmatprep.subr.mxu0 0.0
    %1106 = vmatpush1.msra.mxu0 0.0
    %1107 = vmatprep.subr.mxu0 0.0
    %1108 = vmatpush1.msra.mxu0 0.0
    %1109 = vmatprep.subr.mxu0 0.0
    %1110 = vmatpush1.msra.mxu0 0.0
    %1111 = vmatprep.subr.mxu0 0.0
    %1112 = vmatpush1.msra.mxu0 0.0
    %1113 = vmatprep.subr.mxu0 0.0
    %1114 = vmatpush1.msra.mxu0 0.0
    %1115 = vmatprep.subr.mxu0 0.0
    %1116 = vmatpush1.msra.mxu0 0.0
    %1117 = vmatprep.mubr.f32.mxu0 0.0
    %1118 = vmatmul.mubr.f32.gmra.mrb[0].mxu0 %v1051
    %v1119 = vpop.f32.mrb[0].mxu0
    %v1120 = vadd.f32 %v67, %v1119
    %v1121 = vpop.f32.mrb[0].mxu0
    %1122 = vdwg.mxu0
    %v1123 = vxor.u32 %v1120, 2147483648
    %v1124 = vmul.f32 %v1123, 1.442695
    %v1125 = vpow.pop %v1124
    %v1126 = vadd.f32 %v1125, 1.0
    %v1127 = vrcp.pop %v1126
    %v1128 = vmul.f32 1.0, %v1127
    %1130 = vrot.lane.b32.xlu0 %v1120, 32
    %v1131 = vpop.permute.xlu0 %1130
    %v1133 = vmul.f32 %v1128, %v1131
    %1135 = vrot.lane.b32.xlu0 %v1133, 64
    %v1136 = vpop.permute.xlu0 %1135
    %v1138 = vadd.f32 %v1120, %v1136
    %v1139 = vtanh.pop %v1138
    %v1140 = vsub.f32 1.0, %v1128
    %1142 = vrot.lane.b32.xlu0 %v1139, 96
    %v1143 = vpop.permute.xlu0 %1142
    %v1145 = vmul.f32 %v1140, %v1143
    %v1147 = vmul.f32 %v1128, %v1048
    %v1148 = vadd.f32 %v1145, %v1147
    %1150 = vrot.lane.b32.xlu0 %v1148, 96
    %v1151 = vpop.permute.xlu0 %1150
    %v1152 = vsel %vm145, %v1151, 0
    %1154 = vmatprep.subr.mxu0 0.0
    %1155 = vmatpush1.msra.mxu0 %v57
    %1156 = vmatprep.subr.mxu0 0.0
    %1157 = vmatpush1.msra.mxu0 %v58
    %1158 = vmatprep.subr.mxu0 0.0
    %1159 = vmatpush1.msra.mxu0 %v59
    %1160 = vmatprep.subr.mxu0 0.0
    %1161 = vmatpush1.msra.mxu0 %v60
    %1162 = vmatprep.subr.mxu0 0.0
    %1163 = vmatpush1.msra.mxu0 0.0
    %1164 = vmatprep.subr.mxu0 0.0
    %1165 = vmatpush1.msra.mxu0 0.0
    %1166 = vmatprep.subr.mxu0 0.0
    %1167 = vmatpush1.msra.mxu0 0.0
    %1168 = vmatprep.subr.mxu0 0.0
    %1169 = vmatpush1.msra.mxu0 0.0
    %1170 = vmatprep.subr.mxu0 0.0
    %1171 = vmatpush1.msra.mxu0 0.0
    %1172 = vmatprep.subr.mxu0 0.0
    %1173 = vmatpush1.msra.mxu0 0.0
    %1174 = vmatprep.subr.mxu0 0.0
    %1175 = vmatpush1.msra.mxu0 0.0
    %1176 = vmatprep.subr.mxu0 0.0
    %1177 = vmatpush1.msra.mxu0 0.0
    %1178 = vmatprep.subr.mxu0 0.0
    %1179 = vmatpush1.msra.mxu0 0.0
    %1180 = vmatprep.subr.mxu0 0.0
    %1181 = vmatpush1.msra.mxu0 0.0
    %1182 = vmatprep.subr.mxu0 0.0
    %1183 = vmatpush1.msra.mxu0 0.0
    %1184 = vmatprep.subr.mxu0 0.0
    %1185 = vmatpush1.msra.mxu0 0.0
    %1186 = vmatprep.subr.mxu0 0.0
    %1187 = vmatpush1.msra.mxu0 0.0
    %1188 = vmatprep.subr.mxu0 0.0
    %1189 = vmatpush1.msra.mxu0 0.0
    %1190 = vmatprep.subr.mxu0 0.0
    %1191 = vmatpush1.msra.mxu0 0.0
    %1192 = vmatprep.subr.mxu0 0.0
    %1193 = vmatpush1.msra.mxu0 0.0
    %1194 = vmatprep.subr.mxu0 0.0
    %1195 = vmatpush1.msra.mxu0 0.0
    %1196 = vmatprep.subr.mxu0 0.0
    %1197 = vmatpush1.msra.mxu0 0.0
    %1198 = vmatprep.subr.mxu0 0.0
    %1199 = vmatpush1.msra.mxu0 0.0
    %1200 = vmatprep.subr.mxu0 0.0
    %1201 = vmatpush1.msra.mxu0 0.0
    %1202 = vmatprep.subr.mxu0 0.0
    %1203 = vmatpush1.msra.mxu0 0.0
    %1204 = vmatprep.subr.mxu0 0.0
    %1205 = vmatpush1.msra.mxu0 0.0
    %1206 = vmatprep.subr.mxu0 0.0
    %1207 = vmatpush1.msra.mxu0 0.0
    %1208 = vmatprep.subr.mxu0 0.0
    %1209 = vmatpush1.msra.mxu0 0.0
    %1210 = vmatprep.subr.mxu0 0.0
    %1211 = vmatpush1.msra.mxu0 0.0
    %1212 = vmatprep.subr.mxu0 0.0
    %1213 = vmatpush1.msra.mxu0 0.0
    %1214 = vmatprep.subr.mxu0 0.0
    %1215 = vmatpush1.msra.mxu0 0.0
    %1216 = vmatprep.subr.mxu0 0.0
    %1217 = vmatpush1.msra.mxu0 0.0
    %1218 = vmatprep.mubr.f32.mxu0 0.0
    %1219 = vmatmul.mubr.f32.gmra.mrb[0].mxu0 %v1152
    %v1220 = vpop.f32.mrb[0].mxu0
    %v1221 = vadd.f32 %v68, %v1220
    %v1222 = vpop.f32.mrb[0].mxu0
    %1223 = vdwg.mxu0
    %v1224 = vxor.u32 %v1221, 2147483648
    %v1225 = vmul.f32 %v1224, 1.442695
    %v1226 = vpow.pop %v1225
    %v1227 = vadd.f32 %v1226, 1.0
    %v1228 = vrcp.pop %v1227
    %v1229 = vmul.f32 1.0, %v1228
    %1231 = vrot.lane.b32.xlu0 %v1221, 32
    %v1232 = vpop.permute.xlu0 %1231
    %v1234 = vmul.f32 %v1229, %v1232
    %1236 = vrot.lane.b32.xlu0 %v1234, 64
    %v1237 = vpop.permute.xlu0 %1236
    %v1239 = vadd.f32 %v1221, %v1237
    %v1240 = vtanh.pop %v1239
    %v1241 = vsub.f32 1.0, %v1229
    %1243 = vrot.lane.b32.xlu0 %v1240, 96
    %v1244 = vpop.permute.xlu0 %1243
    %v1246 = vmul.f32 %v1241, %v1244
    %v1247 = vmul.f32 %v1229, %v1148
    %v1248 = vadd.f32 %v1246, %v1247
    %1250 = vrot.lane.b32.xlu0 %v1248, 96
    %v1251 = vpop.permute.xlu0 %1250
    %v1252 = vsel %vm145, %v1251, 0
    %1254 = vmatprep.subr.mxu0 0.0
    %1255 = vmatpush1.msra.mxu0 %v57
    %1256 = vmatprep.subr.mxu0 0.0
    %1257 = vmatpush1.msra.mxu0 %v58
    %1258 = vmatprep.subr.mxu0 0.0
    %1259 = vmatpush1.msra.mxu0 %v59
    %1260 = vmatprep.subr.mxu0 0.0
    %1261 = vmatpush1.msra.mxu0 %v60
    %1262 = vmatprep.subr.mxu0 0.0
    %1263 = vmatpush1.msra.mxu0 0.0
    %1264 = vmatprep.subr.mxu0 0.0
    %1265 = vmatpush1.msra.mxu0 0.0
    %1266 = vmatprep.subr.mxu0 0.0
    %1267 = vmatpush1.msra.mxu0 0.0
    %1268 = vmatprep.subr.mxu0 0.0
    %1269 = vmatpush1.msra.mxu0 0.0
    %1270 = vmatprep.subr.mxu0 0.0
    %1271 = vmatpush1.msra.mxu0 0.0
    %1272 = vmatprep.subr.mxu0 0.0
    %1273 = vmatpush1.msra.mxu0 0.0
    %1274 = vmatprep.subr.mxu0 0.0
    %1275 = vmatpush1.msra.mxu0 0.0
    %1276 = vmatprep.subr.mxu0 0.0
    %1277 = vmatpush1.msra.mxu0 0.0
    %1278 = vmatprep.subr.mxu0 0.0
    %1279 = vmatpush1.msra.mxu0 0.0
    %1280 = vmatprep.subr.mxu0 0.0
    %1281 = vmatpush1.msra.mxu0 0.0
    %1282 = vmatprep.subr.mxu0 0.0
    %1283 = vmatpush1.msra.mxu0 0.0
    %1284 = vmatprep.subr.mxu0 0.0
    %1285 = vmatpush1.msra.mxu0 0.0
    %1286 = vmatprep.subr.mxu0 0.0
    %1287 = vmatpush1.msra.mxu0 0.0
    %1288 = vmatprep.subr.mxu0 0.0
    %1289 = vmatpush1.msra.mxu0 0.0
    %1290 = vmatprep.subr.mxu0 0.0
    %1291 = vmatpush1.msra.mxu0 0.0
    %1292 = vmatprep.subr.mxu0 0.0
    %1293 = vmatpush1.msra.mxu0 0.0
    %1294 = vmatprep.subr.mxu0 0.0
    %1295 = vmatpush1.msra.mxu0 0.0
    %1296 = vmatprep.subr.mxu0 0.0
    %1297 = vmatpush1.msra.mxu0 0.0
    %1298 = vmatprep.subr.mxu0 0.0
    %1299 = vmatpush1.msra.mxu0 0.0
    %1300 = vmatprep.subr.mxu0 0.0
    %1301 = vmatpush1.msra.mxu0 0.0
    %1302 = vmatprep.subr.mxu0 0.0
    %1303 = vmatpush1.msra.mxu0 0.0
    %1304 = vmatprep.subr.mxu0 0.0
    %1305 = vmatpush1.msra.mxu0 0.0
    %1306 = vmatprep.subr.mxu0 0.0
    %1307 = vmatpush1.msra.mxu0 0.0
    %1308 = vmatprep.subr.mxu0 0.0
    %1309 = vmatpush1.msra.mxu0 0.0
    %1310 = vmatprep.subr.mxu0 0.0
    %1311 = vmatpush1.msra.mxu0 0.0
    %1312 = vmatprep.subr.mxu0 0.0
    %1313 = vmatpush1.msra.mxu0 0.0
    %1314 = vmatprep.subr.mxu0 0.0
    %1315 = vmatpush1.msra.mxu0 0.0
    %1316 = vmatprep.subr.mxu0 0.0
    %1317 = vmatpush1.msra.mxu0 0.0
    %1318 = vmatprep.mubr.f32.mxu0 0.0
    %1319 = vmatmul.mubr.f32.gmra.mrb[0].mxu0 %v1252
    %v1320 = vpop.f32.mrb[0].mxu0
    %v1321 = vadd.f32 %v68, %v1320
    %v1322 = vpop.f32.mrb[0].mxu0
    %1323 = vdwg.mxu0
    %v1324 = vxor.u32 %v1321, 2147483648
    %v1325 = vmul.f32 %v1324, 1.442695
    %v1326 = vpow.pop %v1325
    %v1327 = vadd.f32 %v1326, 1.0
    %v1328 = vrcp.pop %v1327
    %v1329 = vmul.f32 1.0, %v1328
    %1331 = vrot.lane.b32.xlu0 %v1321, 32
    %v1332 = vpop.permute.xlu0 %1331
    %v1334 = vmul.f32 %v1329, %v1332
    %1336 = vrot.lane.b32.xlu0 %v1334, 64
    %v1337 = vpop.permute.xlu0 %1336
    %v1339 = vadd.f32 %v1321, %v1337
    %v1340 = vtanh.pop %v1339
    %v1341 = vsub.f32 1.0, %v1329
    %1343 = vrot.lane.b32.xlu0 %v1340, 96
    %v1344 = vpop.permute.xlu0 %1343
    %v1346 = vmul.f32 %v1341, %v1344
    %v1347 = vmul.f32 %v1329, %v1248
    %v1348 = vadd.f32 %v1346, %v1347
    %1350 = vrot.lane.b32.xlu0 %v1348, 96
    %v1351 = vpop.permute.xlu0 %1350
    %v1352 = vsel %vm145, %v1351, 0
    %1354 = vmatprep.subr.mxu0 0.0
    %1355 = vmatpush1.msra.mxu0 %v57
    %1356 = vmatprep.subr.mxu0 0.0
    %1357 = vmatpush1.msra.mxu0 %v58
    %1358 = vmatprep.subr.mxu0 0.0
    %1359 = vmatpush1.msra.mxu0 %v59
    %1360 = vmatprep.subr.mxu0 0.0
    %1361 = vmatpush1.msra.mxu0 %v60
    %1362 = vmatprep.subr.mxu0 0.0
    %1363 = vmatpush1.msra.mxu0 0.0
    %1364 = vmatprep.subr.mxu0 0.0
    %1365 = vmatpush1.msra.mxu0 0.0
    %1366 = vmatprep.subr.mxu0 0.0
    %1367 = vmatpush1.msra.mxu0 0.0
    %1368 = vmatprep.subr.mxu0 0.0
    %1369 = vmatpush1.msra.mxu0 0.0
    %1370 = vmatprep.subr.mxu0 0.0
    %1371 = vmatpush1.msra.mxu0 0.0
    %1372 = vmatprep.subr.mxu0 0.0
    %1373 = vmatpush1.msra.mxu0 0.0
    %1374 = vmatprep.subr.mxu0 0.0
    %1375 = vmatpush1.msra.mxu0 0.0
    %1376 = vmatprep.subr.mxu0 0.0
    %1377 = vmatpush1.msra.mxu0 0.0
    %1378 = vmatprep.subr.mxu0 0.0
    %1379 = vmatpush1.msra.mxu0 0.0
    %1380 = vmatprep.subr.mxu0 0.0
    %1381 = vmatpush1.msra.mxu0 0.0
    %1382 = vmatprep.subr.mxu0 0.0
    %1383 = vmatpush1.msra.mxu0 0.0
    %1384 = vmatprep.subr.mxu0 0.0
    %1385 = vmatpush1.msra.mxu0 0.0
    %1386 = vmatprep.subr.mxu0 0.0
    %1387 = vmatpush1.msra.mxu0 0.0
    %1388 = vmatprep.subr.mxu0 0.0
    %1389 = vmatpush1.msra.mxu0 0.0
    %1390 = vmatprep.subr.mxu0 0.0
    %1391 = vmatpush1.msra.mxu0 0.0
    %1392 = vmatprep.subr.mxu0 0.0
    %1393 = vmatpush1.msra.mxu0 0.0
    %1394 = vmatprep.subr.mxu0 0.0
    %1395 = vmatpush1.msra.mxu0 0.0
    %1396 = vmatprep.subr.mxu0 0.0
    %1397 = vmatpush1.msra.mxu0 0.0
    %1398 = vmatprep.subr.mxu0 0.0
    %1399 = vmatpush1.msra.mxu0 0.0
    %1400 = vmatprep.subr.mxu0 0.0
    %1401 = vmatpush1.msra.mxu0 0.0
    %1402 = vmatprep.subr.mxu0 0.0
    %1403 = vmatpush1.msra.mxu0 0.0
    %1404 = vmatprep.subr.mxu0 0.0
    %1405 = vmatpush1.msra.mxu0 0.0
    %1406 = vmatprep.subr.mxu0 0.0
    %1407 = vmatpush1.msra.mxu0 0.0
    %1408 = vmatprep.subr.mxu0 0.0
    %1409 = vmatpush1.msra.mxu0 0.0
    %1410 = vmatprep.subr.mxu0 0.0
    %1411 = vmatpush1.msra.mxu0 0.0
    %1412 = vmatprep.subr.mxu0 0.0
    %1413 = vmatpush1.msra.mxu0 0.0
    %1414 = vmatprep.subr.mxu0 0.0
    %1415 = vmatpush1.msra.mxu0 0.0
    %1416 = vmatprep.subr.mxu0 0.0
    %1417 = vmatpush1.msra.mxu0 0.0
    %1418 = vmatprep.mubr.f32.mxu0 0.0
    %1419 = vmatmul.mubr.f32.gmra.mrb[0].mxu0 %v1352
    %v1420 = vpop.f32.mrb[0].mxu0
    %v1421 = vadd.f32 %v68, %v1420
    %v1422 = vpop.f32.mrb[0].mxu0
    %1423 = vdwg.mxu0
    %v1424 = vxor.u32 %v1421, 2147483648
    %v1425 = vmul.f32 %v1424, 1.442695
    %v1426 = vpow.pop %v1425
    %v1427 = vadd.f32 %v1426, 1.0
    %v1428 = vrcp.pop %v1427
    %v1429 = vmul.f32 1.0, %v1428
    %1431 = vrot.lane.b32.xlu0 %v1421, 32
    %v1432 = vpop.permute.xlu0 %1431
    %v1434 = vmul.f32 %v1429, %v1432
    %1436 = vrot.lane.b32.xlu0 %v1434, 64
    %v1437 = vpop.permute.xlu0 %1436
    %v1439 = vadd.f32 %v1421, %v1437
    %v1440 = vtanh.pop %v1439
    %v1441 = vsub.f32 1.0, %v1429
    %1443 = vrot.lane.b32.xlu0 %v1440, 96
    %v1444 = vpop.permute.xlu0 %1443
    %v1446 = vmul.f32 %v1441, %v1444
    %v1447 = vmul.f32 %v1429, %v1348
    %v1448 = vadd.f32 %v1446, %v1447
    %1450 = vrot.lane.b32.xlu0 %v1448, 96
    %v1451 = vpop.permute.xlu0 %1450
    %v1452 = vsel %vm145, %v1451, 0
    %1454 = vmatprep.subr.mxu0 0.0
    %1455 = vmatpush1.msra.mxu0 %v57
    %1456 = vmatprep.subr.mxu0 0.0
    %1457 = vmatpush1.msra.mxu0 %v58
    %1458 = vmatprep.subr.mxu0 0.0
    %1459 = vmatpush1.msra.mxu0 %v59
    %1460 = vmatprep.subr.mxu0 0.0
    %1461 = vmatpush1.msra.mxu0 %v60
    %1462 = vmatprep.subr.mxu0 0.0
    %1463 = vmatpush1.msra.mxu0 0.0
    %1464 = vmatprep.subr.mxu0 0.0
    %1465 = vmatpush1.msra.mxu0 0.0
    %1466 = vmatprep.subr.mxu0 0.0
    %1467 = vmatpush1.msra.mxu0 0.0
    %1468 = vmatprep.subr.mxu0 0.0
    %1469 = vmatpush1.msra.mxu0 0.0
    %1470 = vmatprep.subr.mxu0 0.0
    %1471 = vmatpush1.msra.mxu0 0.0
    %1472 = vmatprep.subr.mxu0 0.0
    %1473 = vmatpush1.msra.mxu0 0.0
    %1474 = vmatprep.subr.mxu0 0.0
    %1475 = vmatpush1.msra.mxu0 0.0
    %1476 = vmatprep.subr.mxu0 0.0
    %1477 = vmatpush1.msra.mxu0 0.0
    %1478 = vmatprep.subr.mxu0 0.0
    %1479 = vmatpush1.msra.mxu0 0.0
    %1480 = vmatprep.subr.mxu0 0.0
    %1481 = vmatpush1.msra.mxu0 0.0
    %1482 = vmatprep.subr.mxu0 0.0
    %1483 = vmatpush1.msra.mxu0 0.0
    %1484 = vmatprep.subr.mxu0 0.0
    %1485 = vmatpush1.msra.mxu0 0.0
    %1486 = vmatprep.subr.mxu0 0.0
    %1487 = vmatpush1.msra.mxu0 0.0
    %1488 = vmatprep.subr.mxu0 0.0
    %1489 = vmatpush1.msra.mxu0 0.0
    %1490 = vmatprep.subr.mxu0 0.0
    %1491 = vmatpush1.msra.mxu0 0.0
    %1492 = vmatprep.subr.mxu0 0.0
    %1493 = vmatpush1.msra.mxu0 0.0
    %1494 = vmatprep.subr.mxu0 0.0
    %1495 = vmatpush1.msra.mxu0 0.0
    %1496 = vmatprep.subr.mxu0 0.0
    %1497 = vmatpush1.msra.mxu0 0.0
    %1498 = vmatprep.subr.mxu0 0.0
    %1499 = vmatpush1.msra.mxu0 0.0
    %1500 = vmatprep.subr.mxu0 0.0
    %1501 = vmatpush1.msra.mxu0 0.0
    %1502 = vmatprep.subr.mxu0 0.0
    %1503 = vmatpush1.msra.mxu0 0.0
    %1504 = vmatprep.subr.mxu0 0.0
    %1505 = vmatpush1.msra.mxu0 0.0
    %1506 = vmatprep.subr.mxu0 0.0
    %1507 = vmatpush1.msra.mxu0 0.0
    %1508 = vmatprep.subr.mxu0 0.0
    %1509 = vmatpush1.msra.mxu0 0.0
    %1510 = vmatprep.subr.mxu0 0.0
    %1511 = vmatpush1.msra.mxu0 0.0
    %1512 = vmatprep.subr.mxu0 0.0
    %1513 = vmatpush1.msra.mxu0 0.0
    %1514 = vmatprep.subr.mxu0 0.0
    %1515 = vmatpush1.msra.mxu0 0.0
    %1516 = vmatprep.subr.mxu0 0.0
    %1517 = vmatpush1.msra.mxu0 0.0
    %1518 = vmatprep.mubr.f32.mxu0 0.0
    %1519 = vmatmul.mubr.f32.gmra.mrb[0].mxu0 %v1452
    %v1520 = vpop.f32.mrb[0].mxu0
    %v1521 = vadd.f32 %v68, %v1520
    %v1522 = vpop.f32.mrb[0].mxu0
    %1523 = vdwg.mxu0
    %v1524 = vxor.u32 %v1521, 2147483648
    %v1525 = vmul.f32 %v1524, 1.442695
    %v1526 = vpow.pop %v1525
    %v1527 = vadd.f32 %v1526, 1.0
    %v1528 = vrcp.pop %v1527
    %v1529 = vmul.f32 1.0, %v1528
    %1531 = vrot.lane.b32.xlu0 %v1521, 32
    %v1532 = vpop.permute.xlu0 %1531
    %v1534 = vmul.f32 %v1529, %v1532
    %1536 = vrot.lane.b32.xlu0 %v1534, 64
    %v1537 = vpop.permute.xlu0 %1536
    %v1539 = vadd.f32 %v1521, %v1537
    %v1540 = vtanh.pop %v1539
    %v1541 = vsub.f32 1.0, %v1529
    %1543 = vrot.lane.b32.xlu0 %v1540, 96
    %v1544 = vpop.permute.xlu0 %1543
    %v1546 = vmul.f32 %v1541, %v1544
    %v1547 = vmul.f32 %v1529, %v1448
    %v1548 = vadd.f32 %v1546, %v1547
    %1550 = vrot.lane.b32.xlu0 %v1548, 96
    %v1551 = vpop.permute.xlu0 %1550
    %v1552 = vsel %vm145, %v1551, 0
    %1554 = vmatprep.subr.mxu0 0.0
    %1555 = vmatpush1.msra.mxu0 %v57
    %1556 = vmatprep.subr.mxu0 0.0
    %1557 = vmatpush1.msra.mxu0 %v58
    %1558 = vmatprep.subr.mxu0 0.0
    %1559 = vmatpush1.msra.mxu0 %v59
    %1560 = vmatprep.subr.mxu0 0.0
    %1561 = vmatpush1.msra.mxu0 %v60
    %1562 = vmatprep.subr.mxu0 0.0
    %1563 = vmatpush1.msra.mxu0 0.0
    %1564 = vmatprep.subr.mxu0 0.0
    %1565 = vmatpush1.msra.mxu0 0.0
    %1566 = vmatprep.subr.mxu0 0.0
    %1567 = vmatpush1.msra.mxu0 0.0
    %1568 = vmatprep.subr.mxu0 0.0
    %1569 = vmatpush1.msra.mxu0 0.0
    %1570 = vmatprep.subr.mxu0 0.0
    %1571 = vmatpush1.msra.mxu0 0.0
    %1572 = vmatprep.subr.mxu0 0.0
    %1573 = vmatpush1.msra.mxu0 0.0
    %1574 = vmatprep.subr.mxu0 0.0
    %1575 = vmatpush1.msra.mxu0 0.0
    %1576 = vmatprep.subr.mxu0 0.0
    %1577 = vmatpush1.msra.mxu0 0.0
    %1578 = vmatprep.subr.mxu0 0.0
    %1579 = vmatpush1.msra.mxu0 0.0
    %1580 = vmatprep.subr.mxu0 0.0
    %1581 = vmatpush1.msra.mxu0 0.0
    %1582 = vmatprep.subr.mxu0 0.0
    %1583 = vmatpush1.msra.mxu0 0.0
    %1584 = vmatprep.subr.mxu0 0.0
    %1585 = vmatpush1.msra.mxu0 0.0
    %1586 = vmatprep.subr.mxu0 0.0
    %1587 = vmatpush1.msra.mxu0 0.0
    %1588 = vmatprep.subr.mxu0 0.0
    %1589 = vmatpush1.msra.mxu0 0.0
    %1590 = vmatprep.subr.mxu0 0.0
    %1591 = vmatpush1.msra.mxu0 0.0
    %1592 = vmatprep.subr.mxu0 0.0
    %1593 = vmatpush1.msra.mxu0 0.0
    %1594 = vmatprep.subr.mxu0 0.0
    %1595 = vmatpush1.msra.mxu0 0.0
    %1596 = vmatprep.subr.mxu0 0.0
    %1597 = vmatpush1.msra.mxu0 0.0
    %1598 = vmatprep.subr.mxu0 0.0
    %1599 = vmatpush1.msra.mxu0 0.0
    %1600 = vmatprep.subr.mxu0 0.0
    %1601 = vmatpush1.msra.mxu0 0.0
    %1602 = vmatprep.subr.mxu0 0.0
    %1603 = vmatpush1.msra.mxu0 0.0
    %1604 = vmatprep.subr.mxu0 0.0
    %1605 = vmatpush1.msra.mxu0 0.0
    %1606 = vmatprep.subr.mxu0 0.0
    %1607 = vmatpush1.msra.mxu0 0.0
    %1608 = vmatprep.subr.mxu0 0.0
    %1609 = vmatpush1.msra.mxu0 0.0
    %1610 = vmatprep.subr.mxu0 0.0
    %1611 = vmatpush1.msra.mxu0 0.0
    %1612 = vmatprep.subr.mxu0 0.0
    %1613 = vmatpush1.msra.mxu0 0.0
    %1614 = vmatprep.subr.mxu0 0.0
    %1615 = vmatpush1.msra.mxu0 0.0
    %1616 = vmatprep.subr.mxu0 0.0
    %1617 = vmatpush1.msra.mxu0 0.0
    %1618 = vmatprep.mubr.f32.mxu0 0.0
    %1619 = vmatmul.mubr.f32.gmra.mrb[0].mxu0 %v1552
    %v1620 = vpop.f32.mrb[0].mxu0
    %v1621 = vadd.f32 %v68, %v1620
    %v1622 = vpop.f32.mrb[0].mxu0
    %1623 = vdwg.mxu0
    %v1624 = vxor.u32 %v1621, 2147483648
    %v1625 = vmul.f32 %v1624, 1.442695
    %v1626 = vpow.pop %v1625
    %v1627 = vadd.f32 %v1626, 1.0
    %v1628 = vrcp.pop %v1627
    %v1629 = vmul.f32 1.0, %v1628
    %1631 = vrot.lane.b32.xlu0 %v1621, 32
    %v1632 = vpop.permute.xlu0 %1631
    %v1634 = vmul.f32 %v1629, %v1632
    %1636 = vrot.lane.b32.xlu0 %v1634, 64
    %v1637 = vpop.permute.xlu0 %1636
    %v1639 = vadd.f32 %v1621, %v1637
    %v1640 = vtanh.pop %v1639
    %v1641 = vsub.f32 1.0, %v1629
    %1643 = vrot.lane.b32.xlu0 %v1640, 96
    %v1644 = vpop.permute.xlu0 %1643
    %v1646 = vmul.f32 %v1641, %v1644
    %v1647 = vmul.f32 %v1629, %v1548
    %v1648 = vadd.f32 %v1646, %v1647
    %1650 = vrot.lane.b32.xlu0 %v1648, 96
    %v1651 = vpop.permute.xlu0 %1650
    %v1652 = vsel %vm145, %v1651, 0
    %1654 = vmatprep.subr.mxu0 0.0
    %1655 = vmatpush1.msra.mxu0 %v57
    %1656 = vmatprep.subr.mxu0 0.0
    %1657 = vmatpush1.msra.mxu0 %v58
    %1658 = vmatprep.subr.mxu0 0.0
    %1659 = vmatpush1.msra.mxu0 %v59
    %1660 = vmatprep.subr.mxu0 0.0
    %1661 = vmatpush1.msra.mxu0 %v60
    %1662 = vmatprep.subr.mxu0 0.0
    %1663 = vmatpush1.msra.mxu0 0.0
    %1664 = vmatprep.subr.mxu0 0.0
    %1665 = vmatpush1.msra.mxu0 0.0
    %1666 = vmatprep.subr.mxu0 0.0
    %1667 = vmatpush1.msra.mxu0 0.0
    %1668 = vmatprep.subr.mxu0 0.0
    %1669 = vmatpush1.msra.mxu0 0.0
    %1670 = vmatprep.subr.mxu0 0.0
    %1671 = vmatpush1.msra.mxu0 0.0
    %1672 = vmatprep.subr.mxu0 0.0
    %1673 = vmatpush1.msra.mxu0 0.0
    %1674 = vmatprep.subr.mxu0 0.0
    %1675 = vmatpush1.msra.mxu0 0.0
    %1676 = vmatprep.subr.mxu0 0.0
    %1677 = vmatpush1.msra.mxu0 0.0
    %1678 = vmatprep.subr.mxu0 0.0
    %1679 = vmatpush1.msra.mxu0 0.0
    %1680 = vmatprep.subr.mxu0 0.0
    %1681 = vmatpush1.msra.mxu0 0.0
    %1682 = vmatprep.subr.mxu0 0.0
    %1683 = vmatpush1.msra.mxu0 0.0
    %1684 = vmatprep.subr.mxu0 0.0
    %1685 = vmatpush1.msra.mxu0 0.0
    %1686 = vmatprep.subr.mxu0 0.0
    %1687 = vmatpush1.msra.mxu0 0.0
    %1688 = vmatprep.subr.mxu0 0.0
    %1689 = vmatpush1.msra.mxu0 0.0
    %1690 = vmatprep.subr.mxu0 0.0
    %1691 = vmatpush1.msra.mxu0 0.0
    %1692 = vmatprep.subr.mxu0 0.0
    %1693 = vmatpush1.msra.mxu0 0.0
    %1694 = vmatprep.subr.mxu0 0.0
    %1695 = vmatpush1.msra.mxu0 0.0
    %1696 = vmatprep.subr.mxu0 0.0
    %1697 = vmatpush1.msra.mxu0 0.0
    %1698 = vmatprep.subr.mxu0 0.0
    %1699 = vmatpush1.msra.mxu0 0.0
    %1700 = vmatprep.subr.mxu0 0.0
    %1701 = vmatpush1.msra.mxu0 0.0
    %1702 = vmatprep.subr.mxu0 0.0
    %1703 = vmatpush1.msra.mxu0 0.0
    %1704 = vmatprep.subr.mxu0 0.0
    %1705 = vmatpush1.msra.mxu0 0.0
    %1706 = vmatprep.subr.mxu0 0.0
    %1707 = vmatpush1.msra.mxu0 0.0
    %1708 = vmatprep.subr.mxu0 0.0
    %1709 = vmatpush1.msra.mxu0 0.0
    %1710 = vmatprep.subr.mxu0 0.0
    %1711 = vmatpush1.msra.mxu0 0.0
    %1712 = vmatprep.subr.mxu0 0.0
    %1713 = vmatpush1.msra.mxu0 0.0
    %1714 = vmatprep.subr.mxu0 0.0
    %1715 = vmatpush1.msra.mxu0 0.0
    %1716 = vmatprep.subr.mxu0 0.0
    %1717 = vmatpush1.msra.mxu0 0.0
    %1718 = vmatprep.mubr.f32.mxu0 0.0
    %1719 = vmatmul.mubr.f32.gmra.mrb[0].mxu0 %v1652
    %v1720 = vpop.f32.mrb[0].mxu0
    %v1721 = vadd.f32 %v68, %v1720
    %v1722 = vpop.f32.mrb[0].mxu0
    %1723 = vdwg.mxu0
    %v1724 = vxor.u32 %v1721, 2147483648
    %v1725 = vmul.f32 %v1724, 1.442695
    %v1726 = vpow.pop %v1725
    %v1727 = vadd.f32 %v1726, 1.0
    %v1728 = vrcp.pop %v1727
    %v1729 = vmul.f32 1.0, %v1728
    %1731 = vrot.lane.b32.xlu0 %v1721, 32
    %v1732 = vpop.permute.xlu0 %1731
    %v1734 = vmul.f32 %v1729, %v1732
    %1736 = vrot.lane.b32.xlu0 %v1734, 64
    %v1737 = vpop.permute.xlu0 %1736
    %v1739 = vadd.f32 %v1721, %v1737
    %v1740 = vtanh.pop %v1739
    %v1741 = vsub.f32 1.0, %v1729
    %1743 = vrot.lane.b32.xlu0 %v1740, 96
    %v1744 = vpop.permute.xlu0 %1743
    %v1746 = vmul.f32 %v1741, %v1744
    %v1747 = vmul.f32 %v1729, %v1648
    %v1748 = vadd.f32 %v1746, %v1747
    %1750 = vrot.lane.b32.xlu0 %v1748, 96
    %v1751 = vpop.permute.xlu0 %1750
    %v1752 = vsel %vm145, %v1751, 0
    %1754 = vmatprep.subr.mxu0 0.0
    %1755 = vmatpush1.msra.mxu0 %v57
    %1756 = vmatprep.subr.mxu0 0.0
    %1757 = vmatpush1.msra.mxu0 %v58
    %1758 = vmatprep.subr.mxu0 0.0
    %1759 = vmatpush1.msra.mxu0 %v59
    %1760 = vmatprep.subr.mxu0 0.0
    %1761 = vmatpush1.msra.mxu0 %v60
    %1762 = vmatprep.subr.mxu0 0.0
    %1763 = vmatpush1.msra.mxu0 0.0
    %1764 = vmatprep.subr.mxu0 0.0
    %1765 = vmatpush1.msra.mxu0 0.0
    %1766 = vmatprep.subr.mxu0 0.0
    %1767 = vmatpush1.msra.mxu0 0.0
    %1768 = vmatprep.subr.mxu0 0.0
    %1769 = vmatpush1.msra.mxu0 0.0
    %1770 = vmatprep.subr.mxu0 0.0
    %1771 = vmatpush1.msra.mxu0 0.0
    %1772 = vmatprep.subr.mxu0 0.0
    %1773 = vmatpush1.msra.mxu0 0.0
    %1774 = vmatprep.subr.mxu0 0.0
    %1775 = vmatpush1.msra.mxu0 0.0
    %1776 = vmatprep.subr.mxu0 0.0
    %1777 = vmatpush1.msra.mxu0 0.0
    %1778 = vmatprep.subr.mxu0 0.0
    %1779 = vmatpush1.msra.mxu0 0.0
    %1780 = vmatprep.subr.mxu0 0.0
    %1781 = vmatpush1.msra.mxu0 0.0
    %1782 = vmatprep.subr.mxu0 0.0
    %1783 = vmatpush1.msra.mxu0 0.0
    %1784 = vmatprep.subr.mxu0 0.0
    %1785 = vmatpush1.msra.mxu0 0.0
    %1786 = vmatprep.subr.mxu0 0.0
    %1787 = vmatpush1.msra.mxu0 0.0
    %1788 = vmatprep.subr.mxu0 0.0
    %1789 = vmatpush1.msra.mxu0 0.0
    %1790 = vmatprep.subr.mxu0 0.0
    %1791 = vmatpush1.msra.mxu0 0.0
    %1792 = vmatprep.subr.mxu0 0.0
    %1793 = vmatpush1.msra.mxu0 0.0
    %1794 = vmatprep.subr.mxu0 0.0
    %1795 = vmatpush1.msra.mxu0 0.0
    %1796 = vmatprep.subr.mxu0 0.0
    %1797 = vmatpush1.msra.mxu0 0.0
    %1798 = vmatprep.subr.mxu0 0.0
    %1799 = vmatpush1.msra.mxu0 0.0
    %1800 = vmatprep.subr.mxu0 0.0
    %1801 = vmatpush1.msra.mxu0 0.0
    %1802 = vmatprep.subr.mxu0 0.0
    %1803 = vmatpush1.msra.mxu0 0.0
    %1804 = vmatprep.subr.mxu0 0.0
    %1805 = vmatpush1.msra.mxu0 0.0
    %1806 = vmatprep.subr.mxu0 0.0
    %1807 = vmatpush1.msra.mxu0 0.0
    %1808 = vmatprep.subr.mxu0 0.0
    %1809 = vmatpush1.msra.mxu0 0.0
    %1810 = vmatprep.subr.mxu0 0.0
    %1811 = vmatpush1.msra.mxu0 0.0
    %1812 = vmatprep.subr.mxu0 0.0
    %1813 = vmatpush1.msra.mxu0 0.0
    %1814 = vmatprep.subr.mxu0 0.0
    %1815 = vmatpush1.msra.mxu0 0.0
    %1816 = vmatprep.subr.mxu0 0.0
    %1817 = vmatpush1.msra.mxu0 0.0
    %1818 = vmatprep.mubr.f32.mxu0 0.0
    %1819 = vmatmul.mubr.f32.gmra.mrb[0].mxu0 %v1752
    %v1820 = vpop.f32.mrb[0].mxu0
    %v1821 = vadd.f32 %v68, %v1820
    %v1822 = vpop.f32.mrb[0].mxu0
    %1823 = vdwg.mxu0
    %v1824 = vxor.u32 %v1821, 2147483648
    %v1825 = vmul.f32 %v1824, 1.442695
    %v1826 = vpow.pop %v1825
    %v1827 = vadd.f32 %v1826, 1.0
    %v1828 = vrcp.pop %v1827
    %v1829 = vmul.f32 1.0, %v1828
    %1831 = vrot.lane.b32.xlu0 %v1821, 32
    %v1832 = vpop.permute.xlu0 %1831
    %v1834 = vmul.f32 %v1829, %v1832
    %1836 = vrot.lane.b32.xlu0 %v1834, 64
    %v1837 = vpop.permute.xlu0 %1836
    %v1839 = vadd.f32 %v1821, %v1837
    %v1840 = vtanh.pop %v1839
    %v1841 = vsub.f32 1.0, %v1829
    %1843 = vrot.lane.b32.xlu0 %v1840, 96
    %v1844 = vpop.permute.xlu0 %1843
    %v1846 = vmul.f32 %v1841, %v1844
    %v1847 = vmul.f32 %v1829, %v1748
    %v1848 = vadd.f32 %v1846, %v1847
    %v1849 = vrot.slane %v1748, 7
    %v1851 = vrot.slane %v1648, 6
    %v1853 = vrot.slane %v1548, 5
    %v1855 = vrot.slane %v1448, 4
    %v1857 = vrot.slane %v1348, 3
    %v1859 = vrot.slane %v1248, 2
    %v1861 = vrot.slane %v1148, 1
    %v1863 = vsel %vm1012, %v1848, %v1849
    %v1864 = vsel %vm1014, %v1863, %v1851
    %v1865 = vsel %vm1016, %v1864, %v1853
    %v1866 = vsel %vm1018, %v1865, %v1855
    %v1867 = vsel %vm1020, %v1866, %v1857
    %v1868 = vsel %vm1022, %v1867, %v1859
    %v1869 = vsel %vm1024, %v1868, %v1861
    %v1870 = vlaneseq
    %v1871 = vshrl.u32 %v1870, 7
    %v1872 = vsub.s32 0, %v1871
    %v1873 = vrot.slane %v69, %v1872
    %1875 = vrot.lane.b32.xlu0 %v1869, 96
    %v1876 = vpop.permute.xlu0 %1875
    %v1877 = vsel %vm145, %v1876, 0
    %1879 = vmatprep.subr.mxu0 0.0
    %1880 = vmatpush1.msra.mxu0 %v61
    %1881 = vmatprep.subr.mxu0 0.0
    %1882 = vmatpush1.msra.mxu0 %v62
    %1883 = vmatprep.subr.mxu0 0.0
    %1884 = vmatpush1.msra.mxu0 %v63
    %1885 = vmatprep.subr.mxu0 0.0
    %1886 = vmatpush1.msra.mxu0 %v64
    %1887 = vmatprep.subr.mxu0 0.0
    %1888 = vmatpush1.msra.mxu0 0.0
    %1889 = vmatprep.subr.mxu0 0.0
    %1890 = vmatpush1.msra.mxu0 0.0
    %1891 = vmatprep.subr.mxu0 0.0
    %1892 = vmatpush1.msra.mxu0 0.0
    %1893 = vmatprep.subr.mxu0 0.0
    %1894 = vmatpush1.msra.mxu0 0.0
    %1895 = vmatprep.subr.mxu0 0.0
    %1896 = vmatpush1.msra.mxu0 0.0
    %1897 = vmatprep.subr.mxu0 0.0
    %1898 = vmatpush1.msra.mxu0 0.0
    %1899 = vmatprep.subr.mxu0 0.0
    %1900 = vmatpush1.msra.mxu0 0.0
    %1901 = vmatprep.subr.mxu0 0.0
    %1902 = vmatpush1.msra.mxu0 0.0
    %1903 = vmatprep.subr.mxu0 0.0
    %1904 = vmatpush1.msra.mxu0 0.0
    %1905 = vmatprep.subr.mxu0 0.0
    %1906 = vmatpush1.msra.mxu0 0.0
    %1907 = vmatprep.subr.mxu0 0.0
    %1908 = vmatpush1.msra.mxu0 0.0
    %1909 = vmatprep.subr.mxu0 0.0
    %1910 = vmatpush1.msra.mxu0 0.0
    %1911 = vmatprep.subr.mxu0 0.0
    %1912 = vmatpush1.msra.mxu0 0.0
    %1913 = vmatprep.subr.mxu0 0.0
    %1914 = vmatpush1.msra.mxu0 0.0
    %1915 = vmatprep.subr.mxu0 0.0
    %1916 = vmatpush1.msra.mxu0 0.0
    %1917 = vmatprep.subr.mxu0 0.0
    %1918 = vmatpush1.msra.mxu0 0.0
    %1919 = vmatprep.subr.mxu0 0.0
    %1920 = vmatpush1.msra.mxu0 0.0
    %1921 = vmatprep.subr.mxu0 0.0
    %1922 = vmatpush1.msra.mxu0 0.0
    %1923 = vmatprep.subr.mxu0 0.0
    %1924 = vmatpush1.msra.mxu0 0.0
    %1925 = vmatprep.subr.mxu0 0.0
    %1926 = vmatpush1.msra.mxu0 0.0
    %1927 = vmatprep.subr.mxu0 0.0
    %1928 = vmatpush1.msra.mxu0 0.0
    %1929 = vmatprep.subr.mxu0 0.0
    %1930 = vmatpush1.msra.mxu0 0.0
    %1931 = vmatprep.subr.mxu0 0.0
    %1932 = vmatpush1.msra.mxu0 0.0
    %1933 = vmatprep.subr.mxu0 0.0
    %1934 = vmatpush1.msra.mxu0 0.0
    %1935 = vmatprep.subr.mxu0 0.0
    %1936 = vmatpush1.msra.mxu0 0.0
    %1937 = vmatprep.subr.mxu0 0.0
    %1938 = vmatpush1.msra.mxu0 0.0
    %1939 = vmatprep.subr.mxu0 0.0
    %1940 = vmatpush1.msra.mxu0 0.0
    %1941 = vmatprep.subr.mxu0 0.0
    %1942 = vmatpush1.msra.mxu0 0.0
    %1943 = vmatprep.mubr.f32.mxu0 0.0
    %1944 = vmatmul.mubr.f32.gmra.mrb[0].mxu0 %v1877
    %v1945 = vpop.f32.mrb[0].mxu0
    %v1946 = vadd.f32 %v1873, %v1945
    %v1947 = vpop.f32.mrb[0].mxu0
    %1948 = vdwg.mxu0
    %v1949 = vld [vmem:[%s0] sm:$0xff]
    %v1950 = vsub.f32 %v1946, %v1949
    %v1951 = vmul.f32 %v1950, %v1950
    %1952 = vadd.xlane.f32.xlu0 %v1951
    %v1953 = vpop.xlane.xlu0 %1952
    %v1954 = vrot.slane %v1953, 4
    %v1955 = vadd.f32 %v1953, %v1954
    %v1956 = vrot.slane %v1955, 2
    %v1957 = vadd.f32 %v1955, %v1956
    %v1958 = vrot.slane %v1957, 1
    %v1959 = vadd.f32 %v1957, %v1958
    %v1960 = vmul.f32 %v1959, 0.0018382353
    %vm1961 = vcmask 0
    %1962 = vst.msk [vmem:[#allocation8] sm:$0x1] %vm1961, %v1960
    // Predicated region
    $region18: #{lstm_autoencoder_forward.1} parent=1 // pred_check
      _
    $region19: #{lstm_autoencoder_forward.1} parent=1 // pred_check_branch
      %1964 = sbr.rel (0) target = $region21
    $region20: #{lstm_autoencoder_forward.1} parent=1 // pred_region
      %s1966 = ssub.s32 128, 128
      %1967 = vsyncadd [#allocation4], %s1966
      %s1969 = sshll.u32 [#allocation5], 4
      %s1970 = int_to_ptr.vmem [resolvable:$true] %s1969
      %1972 = dma.vmem_to_hbm [thread:$0]  %s1970, 128, %s3, [#allocation4]
    $region21: #{lstm_autoencoder_forward.1} parent=1 // pred_fallthru
      _
    // Predicated region
    $region22: #{lstm_autoencoder_forward.1} parent=1 // pred_check
      _
    $region23: #{lstm_autoencoder_forward.1} parent=1 // pred_check_branch
      %1974 = sbr.rel (0) target = $region25
    $region24: #{lstm_autoencoder_forward.1} parent=1 // pred_region
      %s1976 = ssub.s32 16, 16
      %1977 = vsyncadd [#allocation7], %s1976
      %s1979 = sshll.u32 [#allocation6], 4
      %s1980 = int_to_ptr.vmem [resolvable:$true] %s1979
      %1982 = dma.vmem_to_hbm [thread:$0]  %s1980, 16, %s4, [#allocation7]
    $region25: #{lstm_autoencoder_forward.1} parent=1 // pred_fallthru
      _
    // Predicated region
    $region26: #{lstm_autoencoder_forward.1} parent=1 // pred_check
      _
    $region27: #{lstm_autoencoder_forward.1} parent=1 // pred_check_branch
      %1984 = sbr.rel (0) target = $region29
    $region28: #{lstm_autoencoder_forward.1} parent=1 // pred_region
      %s1986 = ssub.s32 16, 16
      %1987 = vsyncadd [#allocation7], %s1986
      %s1989 = sshll.u32 [#allocation8], 4
      %s1990 = int_to_ptr.vmem [resolvable:$true] %s1989
      %1992 = dma.vmem_to_hbm [thread:$0]  %s1990, 16, %s5, [#allocation7]
    $region29: #{lstm_autoencoder_forward.1} parent=1 // pred_fallthru
      _
    // Predicated region
    $region30: #{lstm_autoencoder_forward.1} parent=1 // pred_check
      _
    $region31: #{lstm_autoencoder_forward.1} parent=1 // pred_check_branch
      %1994 = sbr.rel (0) target = $region33
    $region32: #{lstm_autoencoder_forward.1} parent=1 // pred_region
      %1995 = dma.done [#allocation4], 128
    $region33: #{lstm_autoencoder_forward.1} parent=1 // pred_fallthru
      _
    // Predicated region
    $region34: #{lstm_autoencoder_forward.1} parent=1 // pred_check
      _
    $region35: #{lstm_autoencoder_forward.1} parent=1 // pred_check_branch
      %1997 = sbr.rel (0) target = $region37
    $region36: #{lstm_autoencoder_forward.1} parent=1 // pred_region
      %1998 = dma.done [#allocation7], 16
    $region37: #{lstm_autoencoder_forward.1} parent=1 // pred_fallthru
      _
    // Predicated region
    $region38: #{lstm_autoencoder_forward.1} parent=1 // pred_check
      _
    $region39: #{lstm_autoencoder_forward.1} parent=1 // pred_check_branch
      %2000 = sbr.rel (0) target = $region41
    $region40: #{lstm_autoencoder_forward.1} parent=1 // pred_region
      %2001 = dma.done [#allocation7], 16
    $region41: #{lstm_autoencoder_forward.1} parent=1 // pred_fallthru
      _
    %2002 = vsyncpa [#allocation3], 1
    %2003 = vsyncpa [#allocation4], 1
    %2004 = vsyncpa [#allocation7], 1

</llo_original>
